<compile_context>
chip_gen: v7x
topology: tpu7x:2x2x1
jax: 0.10.0
libtpu: 0.0.40
codegen_flags: <defaults>
</compile_context>

<pallas_src>
import functools

import jax
import jax.numpy as jnp
from jax import lax
from jax.experimental import pallas as pl
from jax.experimental.pallas import tpu as pltpu

_TRANS_B = (((1,), (1,)), ((), ()))   # A @ B^T contraction (MXU trans_b, no XLU transpose)


# --------------------------- kernel 1: dual GATConv + PReLU ---------------------------
def _gat_kernel(x_full_ref, x_tile_ref, adj_ref, w_ref, asrc_ref, adst_ref,
                b_ref, prelu_ref, h1_ref, h2_ref, *, use_bf16_exp):
    F = h1_ref.shape[1]
    alpha = prelu_ref[0]                                        # PReLU weight (num_parameters=1)

    # fused branch projection x @ [w1|w2]; result kept only as bf16 (f32 acc on MXU)
    h_src = jnp.dot(x_full_ref[...].astype(jnp.bfloat16), w_ref[...],
                    preferred_element_type=jnp.float32).astype(jnp.bfloat16)      # [N, 2F]
    h_dst = jnp.dot(x_tile_ref[...].astype(jnp.bfloat16), w_ref[...],
                    preferred_element_type=jnp.float32).astype(jnp.bfloat16)      # [Tn, 2F]

    # attention-score reductions via MXU: rows of asrc/adst are [a1 | 0] and [0 | a2]
    s_src = lax.dot_general(asrc_ref[...], h_src, _TRANS_B,
                            preferred_element_type=jnp.float32)                   # [2, N]
    s_dst = lax.dot_general(h_dst, adst_ref[...], _TRANS_B,
                            preferred_element_type=jnp.float32)                   # [Tn, 2]

    edge = adj_ref[...] != 0                                    # bool mask, shared by both branches

    def branch(col):
        e = s_dst[:, col:col + 1] + s_src[col:col + 1, :]       # e[i, j] = a_dst.h_i + a_src.h_j
        e = jnp.where(e > 0, e, 0.2 * e)                        # LeakyReLU(0.2)
        # masked row-max -> numerically safe softmax; select keeps masked entries at exactly 0
        m = jnp.max(jnp.where(edge, e, -jnp.inf), axis=-1, keepdims=True)
        if use_bf16_exp:                                        # v6e / v7x: bf16 EUP ~2x exp rate
            p = jnp.where(edge, jnp.exp((e - m).astype(jnp.bfloat16)), 0.0)
            p_mx = p
        else:                                                   # v5e / interpret: f32 elementwise
            p = jnp.where(edge, jnp.exp(e - m), 0.0)
            p_mx = p.astype(jnp.bfloat16)
        # normalize AFTER the aggregation matmul (N*F scaling instead of N*N)
        h_b = h_src[:, col * F:(col + 1) * F]
        g_un = jnp.dot(p_mx, h_b, preferred_element_type=jnp.float32)             # [Tn, F]
        denom = jnp.sum(p, axis=-1, keepdims=True, dtype=jnp.float32)             # >=1 (self loop)
        g = g_un * pl.reciprocal(denom, approx=True) + b_ref[col:col + 1, :]
        return jnp.where(g > 0, g, alpha * g)                   # PReLU

    h1_ref[...] = branch(0)
    h2_ref[...] = branch(1)


# --------------------- kernel 2: SemanticAttention + branch mixing ---------------------
def _semantic_mix_kernel(h1_ref, h2_ref, wsa1_ref, bsa1_ref, wsa2_ref, out_ref):
    h1 = h1_ref[...]
    h2 = h2_ref[...]
    h = h1 + h2
    # beta = softmax_P( mean_n( tanh(h @ W1 + b1) ) @ W2 )   (mean commutes with the linear W2)
    z = jnp.tanh(jnp.dot(h.astype(jnp.bfloat16), wsa1_ref[...],
                         preferred_element_type=jnp.float32) + bsa1_ref[...])
    zbar = jnp.mean(z, axis=0, keepdims=True)                                      # [1, F]
    w = jnp.dot(zbar.astype(jnp.bfloat16), wsa2_ref[...],
                preferred_element_type=jnp.float32)                                # [1, P]
    w = w - jnp.max(w, axis=-1, keepdims=True)
    ew = jnp.exp(w)
    beta = ew / jnp.sum(ew, axis=-1, keepdims=True)             # exact: scales the whole output
    # att_weights (== beta) mixes the two branch embeddings (requires P == out_channels)
    out_ref[...] = h2 + beta * (h1 - h2)


# ------------------------------------ wrapper ------------------------------------
def preprocess_adjacency(adj):
    """Dense adjacency -> int8 edge mask. Build ONCE and reuse across layers / calls."""
    return (adj != 0).astype(jnp.int8)


def _use_bf16_exp():
    try:
        kind = jax.devices()[0].device_kind.lower()
    except Exception:
        return False
    return ("v6" in kind) or ("v7" in kind)      # no bf16 EUP/VPU on v5e and older


def han_layer(x, adj_mask_i8, params, *, tile_n=128):
    N, F_in = x.shape
    F = params["w1"].shape[1]
    P = params["wsa2"].shape[1]
    f32, bf16 = jnp.float32, jnp.bfloat16

    tile_n = min(tile_n, N)
    assert N % tile_n == 0, "TODO(synk): handle a ragged last dst-row tile"
    n_tiles = N // tile_n

    # one-time wrapper-side fusion of the two branches' weights
    w_cat = jnp.concatenate([params["w1"], params["w2"]], axis=1).astype(bf16)     # [F_in, 2F]
    zero = jnp.zeros((1, F), f32)
    a_src = jnp.concatenate(
        [jnp.concatenate([params["as1"], zero], axis=1),
         jnp.concatenate([zero, params["as2"]], axis=1)], axis=0).astype(bf16)     # [2, 2F]
    a_dst = jnp.concatenate(
        [jnp.concatenate([params["ad1"], zero], axis=1),
         jnp.concatenate([zero, params["ad2"]], axis=1)], axis=0).astype(bf16)     # [2, 2F]
    b_cat = jnp.concatenate([params["b1"], params["b2"]], axis=0).astype(f32)       # [2, F]
    prelu = params["prelu"].reshape(1).astype(f32)               # 1-D -> 4 B in SMEM
    x = x.astype(f32)

    smem = pltpu.MemorySpace.SMEM
    vmem = pltpu.MemorySpace.VMEM

    gat = functools.partial(_gat_kernel, use_bf16_exp=_use_bf16_exp())

    gat_flops = (2 * N * F_in * 2 * F * (n_tiles + 1)    # projection (recomputed per tile)
                 + 2 * 2 * N * 2 * F * 2                 # score matmuls
                 + 2 * 2 * N * N * F                     # aggregations
                 + 10 * N * N)                           # mask / softmax elementwise
    h1, h2 = pl.pallas_call(
        gat,
        out_shape=(jax.ShapeDtypeStruct((N, F), f32),
                   jax.ShapeDtypeStruct((N, F), f32)),
        grid=(n_tiles,),
        in_specs=[
            pl.BlockSpec((N, F_in), lambda i: (0, 0)),           # x, src side (resident)
            pl.BlockSpec((tile_n, F_in), lambda i: (i, 0)),      # x, dst tile
            pl.BlockSpec((tile_n, N), lambda i: (i, 0)),         # adjacency tile (int8)
            pl.BlockSpec((F_in, 2 * F), lambda i: (0, 0)),       # [w1 | w2]
            pl.BlockSpec((2, 2 * F), lambda i: (0, 0)),          # a_src
            pl.BlockSpec((2, 2 * F), lambda i: (0, 0)),          # a_dst
            pl.BlockSpec((2, F), lambda i: (0, 0)),              # biases
            pl.BlockSpec(memory_space=smem),                     # PReLU scalar
        ],
        out_specs=(pl.BlockSpec((tile_n, F), lambda i: (i, 0)),
                   pl.BlockSpec((tile_n, F), lambda i: (i, 0))),
        compiler_params=pltpu.CompilerParams(dimension_semantics=("parallel",)),
        cost_estimate=pl.CostEstimate(
            flops=gat_flops,
            transcendentals=2 * N * N + 2 * N,
            bytes_accessed=int(N * F_in * 4 + N * N + 2 * N * F * 4)),
    )(x, x, adj_mask_i8, w_cat, a_src, a_dst, b_cat, prelu)

    # semantic attention needs a full-graph mean over nodes -> small gridless kernel
    out = pl.pallas_call(
        _semantic_mix_kernel,
        out_shape=jax.ShapeDtypeStruct((N, F), f32),
        in_specs=[pl.BlockSpec(memory_space=vmem)] * 5,
        out_specs=pl.BlockSpec(memory_space=vmem),
        cost_estimate=pl.CostEstimate(
            flops=2 * N * F * F + 2 * F * P + 6 * N * F,
            transcendentals=N * F + P,
            bytes_accessed=int(3 * N * F * 4 + F * F * 2 + F * P * 2)),
    )(h1, h2, params["wsa1"].astype(bf16), params["bsa1"].astype(f32),
      params["wsa2"].astype(bf16))
    return out


# ----------------------------- pure-JAX f32 reference -----------------------------
def han_reference(x, adj, p):
    def gat(w, a_s, a_d, b):
        h = x @ w
        e = jnp.sum(h * a_d, -1, keepdims=True) + jnp.sum(h * a_s, -1, keepdims=True).T
        e = jnp.where(e > 0, e, 0.2 * e)
        logits = jnp.where(adj > 0, e, -1e30)
        attn = jax.nn.softmax(logits, axis=-1)
        return attn @ h + b

    alpha = p["prelu"][0]
    prelu = lambda t: jnp.where(t > 0, t, alpha * t)
    h1 = prelu(gat(p["w1"], p["as1"], p["ad1"], p["b1"]))
    h2 = prelu(gat(p["w2"], p["as2"], p["ad2"], p["b2"]))
    h = h1 + h2
    z = jnp.tanh(h @ p["wsa1"] + p["bsa1"])
    beta = jax.nn.softmax(jnp.mean(z @ p["wsa2"], axis=0))
    return beta * h1 + (1.0 - beta) * h2


if __name__ == "__main__":
    N, F_IN, F_OUT, E = 256, 64, 128, 1024   # nodes, in_channels, out_channels, edges

    key = jax.random.PRNGKey(0)
    keys = jax.random.split(key, 16)

    x = jax.random.normal(keys[0], (N, F_IN), jnp.float32)

    # deterministic synthetic edge_index [2, E]; coalesced into a dense mask + self loops
    src = jax.random.randint(keys[1], (E,), 0, N)
    dst = jax.random.randint(keys[2], (E,), 0, N)
    adj = jnp.zeros((N, N), jnp.float32).at[dst, src].set(1.0)
    adj = adj.at[jnp.arange(N), jnp.arange(N)].set(1.0)      # GATConv add_self_loops=True

    s = 0.1
    params = {
        # GATConv1: lin weight (transposed to [F_in, F_out]), att_src/att_dst [1, F_out], bias
        "w1":  s * jax.random.normal(keys[3], (F_IN, F_OUT), jnp.float32),
        "as1": s * jax.random.normal(keys[4], (1, F_OUT), jnp.float32),
        "ad1": s * jax.random.normal(keys[5], (1, F_OUT), jnp.float32),
        "b1":  s * jax.random.normal(keys[6], (1, F_OUT), jnp.float32),
        # GATConv2
        "w2":  s * jax.random.normal(keys[7], (F_IN, F_OUT), jnp.float32),
        "as2": s * jax.random.normal(keys[8], (1, F_OUT), jnp.float32),
        "ad2": s * jax.random.normal(keys[9], (1, F_OUT), jnp.float32),
        "b2":  s * jax.random.normal(keys[10], (1, F_OUT), jnp.float32),
        # PReLU (num_parameters=1, default init 0.25)
        "prelu": jnp.full((1,), 0.25, jnp.float32),
        # SemanticAttention: Linear(F_out, F_out) + bias, then Linear(F_out, P=F_out, bias=False)
        "wsa1": s * jax.random.normal(keys[11], (F_OUT, F_OUT), jnp.float32),
        "bsa1": s * jax.random.normal(keys[12], (1, F_OUT), jnp.float32),
        "wsa2": s * jax.random.normal(keys[13], (F_OUT, F_OUT), jnp.float32),
    }

    adj_mask = preprocess_adjacency(adj)     # built once, reused across layers/calls

    out = jax.block_until_ready(han_layer(x, adj_mask, params, tile_n=128))
    ref = jax.block_until_ready(han_reference(x, adj, params))

    assert out.shape == (N, F_OUT)
    assert bool(jnp.all(jnp.isfinite(out)))
    assert jnp.allclose(out, ref, rtol=2e-2, atol=2e-2), float(jnp.max(jnp.abs(out - ref)))
    print("KERNEL_OK")
</pallas_src>

<mosaic_0001>
module attributes {stable_mosaic.version = 11 : i64} {
  func.func @_gat_kernel(%arg0: i32, %arg1: memref<256x64xf32, #tpu.memory_space<vmem>>, %arg2: memref<128x64xf32, #tpu.memory_space<vmem>>, %arg3: memref<128x256xi8, #tpu.memory_space<vmem>>, %arg4: memref<64x256xbf16, #tpu.memory_space<vmem>>, %arg5: memref<2x256xbf16, #tpu.memory_space<vmem>>, %arg6: memref<2x256xbf16, #tpu.memory_space<vmem>>, %arg7: memref<2x128xf32, #tpu.memory_space<vmem>>, %arg8: memref<1xf32, #tpu.memory_space<smem>>, %arg9: memref<128x128xf32, #tpu.memory_space<vmem>>, %arg10: memref<128x128xf32, #tpu.memory_space<vmem>>) attributes {dimension_semantics = [#tpu.dimension_semantics<parallel>], iteration_bounds = array<i64: 2>, scalar_prefetch = 0 : i64, scratch_operands = 0 : i64, tpu.core_type = #tpu.core_type<tc>, window_params = [{pipeline_mode = #tpu.pipeline_mode<synchronous>, transform_indices = @transform_0, window_bounds = array<i64: 256, 64>}, {transform_indices = @transform_1, window_bounds = array<i64: 128, 64>}, {transform_indices = @transform_2, window_bounds = array<i64: 128, 256>}, {pipeline_mode = #tpu.pipeline_mode<synchronous>, transform_indices = @transform_3, window_bounds = array<i64: 64, 256>}, {pipeline_mode = #tpu.pipeline_mode<synchronous>, transform_indices = @transform_4, window_bounds = array<i64: 2, 256>}, {pipeline_mode = #tpu.pipeline_mode<synchronous>, transform_indices = @transform_5, window_bounds = array<i64: 2, 256>}, {pipeline_mode = #tpu.pipeline_mode<synchronous>, transform_indices = @transform_6, window_bounds = array<i64: 2, 128>}, {transform_indices = @transform_7, window_bounds = array<i64: 1>}, {transform_indices = @transform_8, window_bounds = array<i64: 128, 128>}, {transform_indices = @transform_9, window_bounds = array<i64: 128, 128>}]} {
    %c0 = arith.constant 0 : index
    %0 = memref.load %arg8[%c0] : memref<1xf32, #tpu.memory_space<smem>>
    %c0_0 = arith.constant 0 : index
    %c0_1 = arith.constant 0 : index
    %1 = vector.load %arg1[%c0_0, %c0_1] : memref<256x64xf32, #tpu.memory_space<vmem>>, vector<256x64xf32>
    %2 = arith.truncf %1 : vector<256x64xf32> to vector<256x64xbf16>
    %c0_2 = arith.constant 0 : index
    %c0_3 = arith.constant 0 : index
    %3 = vector.load %arg4[%c0_2, %c0_3] : memref<64x256xbf16, #tpu.memory_space<vmem>>, vector<64x256xbf16>
    %cst = arith.constant dense<0.000000e+00> : vector<256x256xf32>
    %4 = tpu.matmul %2, %3, %cst {dimension_numbers = #tpu.dot_dimension_numbers<[1], [0], [0], [1], [0, 0, 1, 1], [], []>} : vector<256x64xbf16>, vector<64x256xbf16>, vector<256x256xf32> -> vector<256x256xf32>
    %5 = arith.truncf %4 : vector<256x256xf32> to vector<256x256xbf16>
    %c0_4 = arith.constant 0 : index
    %c0_5 = arith.constant 0 : index
    %6 = vector.load %arg2[%c0_4, %c0_5] : memref<128x64xf32, #tpu.memory_space<vmem>>, vector<128x64xf32>
    %7 = arith.truncf %6 : vector<128x64xf32> to vector<128x64xbf16>
    %c0_6 = arith.constant 0 : index
    %c0_7 = arith.constant 0 : index
    %8 = vector.load %arg4[%c0_6, %c0_7] : memref<64x256xbf16, #tpu.memory_space<vmem>>, vector<64x256xbf16>
    %cst_8 = arith.constant dense<0.000000e+00> : vector<128x256xf32>
    %9 = tpu.matmul %7, %8, %cst_8 {dimension_numbers = #tpu.dot_dimension_numbers<[1], [0], [0], [1], [0, 0, 1, 1], [], []>} : vector<128x64xbf16>, vector<64x256xbf16>, vector<128x256xf32> -> vector<128x256xf32>
    %10 = arith.truncf %9 : vector<128x256xf32> to vector<128x256xbf16>
    %c0_9 = arith.constant 0 : index
    %c0_10 = arith.constant 0 : index
    %11 = vector.load %arg5[%c0_9, %c0_10] : memref<2x256xbf16, #tpu.memory_space<vmem>>, vector<2x256xbf16>
    %cst_11 = arith.constant dense<0.000000e+00> : vector<2x256xf32>
    %12 = tpu.matmul %11, %5, %cst_11 {dimension_numbers = #tpu.dot_dimension_numbers<[1], [1], [0], [0], [0, 0, 1, 0], [], []>} : vector<2x256xbf16>, vector<256x256xbf16>, vector<2x256xf32> -> vector<2x256xf32>
    %c0_12 = arith.constant 0 : index
    %c0_13 = arith.constant 0 : index
    %13 = vector.load %arg6[%c0_12, %c0_13] : memref<2x256xbf16, #tpu.memory_space<vmem>>, vector<2x256xbf16>
    %cst_14 = arith.constant dense<0.000000e+00> : vector<128x2xf32>
    %14 = tpu.matmul %10, %13, %cst_14 {dimension_numbers = #tpu.dot_dimension_numbers<[1], [1], [0], [0], [0, 0, 1, 0], [], []>} : vector<128x256xbf16>, vector<2x256xbf16>, vector<128x2xf32> -> vector<128x2xf32>
    %c0_15 = arith.constant 0 : index
    %c0_16 = arith.constant 0 : index
    %15 = vector.load %arg3[%c0_15, %c0_16] : memref<128x256xi8, #tpu.memory_space<vmem>>, vector<128x256xi8>
    %c0_i8 = arith.constant 0 : i8
    %16 = vector.broadcast %c0_i8 : i8 to vector<128x256xi8>
    %17 = arith.cmpi ne, %15, %16 : vector<128x256xi8>
    %18 = vector.extract_strided_slice %14 {offsets = [0, 0], sizes = [128, 1], strides = [1, 1]} : vector<128x2xf32> to vector<128x1xf32>
    %19 = vector.extract_strided_slice %12 {offsets = [0, 0], sizes = [1, 256], strides = [1, 1]} : vector<2x256xf32> to vector<1x256xf32>
    %20 = vector.broadcast %18 : vector<128x1xf32> to vector<128x256xf32>
    %21 = vector.broadcast %19 : vector<1x256xf32> to vector<128x256xf32>
    %22 = arith.addf %20, %21 : vector<128x256xf32>
    %cst_17 = arith.constant 0.000000e+00 : f32
    %23 = vector.broadcast %cst_17 : f32 to vector<128x256xf32>
    %24 = arith.cmpf ogt, %22, %23 : vector<128x256xf32>
    %cst_18 = arith.constant 2.000000e-01 : f32
    %25 = vector.broadcast %cst_18 : f32 to vector<128x256xf32>
    %26 = arith.mulf %25, %22 : vector<128x256xf32>
    %27 = arith.select %24, %22, %26 : vector<128x256xi1>, vector<128x256xf32>
    %cst_19 = arith.constant 0xFF800000 : f32
    %28 = vector.broadcast %cst_19 : f32 to vector<128x256xf32>
    %29 = arith.select %17, %27, %28 : vector<128x256xi1>, vector<128x256xf32>
    %cst_20 = arith.constant dense<0xFF800000> : vector<128xf32>
    %30 = vector.multi_reduction <maximumf>, %29, %cst_20 [1] : vector<128x256xf32> to vector<128xf32>
    %31 = vector.shape_cast %30 : vector<128xf32> to vector<128x1xf32>
    %32 = vector.broadcast %31 : vector<128x1xf32> to vector<128x256xf32>
    %33 = arith.subf %27, %32 : vector<128x256xf32>
    %34 = math.exp %33 : vector<128x256xf32>
    %cst_21 = arith.constant 0.000000e+00 : f32
    %35 = vector.broadcast %cst_21 : f32 to vector<128x256xf32>
    %36 = arith.select %17, %34, %35 : vector<128x256xi1>, vector<128x256xf32>
    %37 = arith.truncf %36 : vector<128x256xf32> to vector<128x256xbf16>
    %38 = vector.extract_strided_slice %5 {offsets = [0, 0], sizes = [256, 128], strides = [1, 1]} : vector<256x256xbf16> to vector<256x128xbf16>
    %cst_22 = arith.constant dense<0.000000e+00> : vector<128x128xf32>
    %39 = tpu.matmul %37, %38, %cst_22 {dimension_numbers = #tpu.dot_dimension_numbers<[1], [0], [0], [1], [0, 0, 1, 1], [], []>} : vector<128x256xbf16>, vector<256x128xbf16>, vector<128x128xf32> -> vector<128x128xf32>
    %cst_23 = arith.constant dense<0.000000e+00> : vector<128xf32>
    %40 = vector.multi_reduction <add>, %36, %cst_23 [1] : vector<128x256xf32> to vector<128xf32>
    %41 = vector.shape_cast %40 : vector<128xf32> to vector<128x1xf32>
    %42 = tpu.reciprocal %41 {approx = true} : vector<128x1xf32> -> vector<128x1xf32>
    %43 = vector.broadcast %42 : vector<128x1xf32> to vector<128x128xf32>
    %44 = arith.mulf %39, %43 : vector<128x128xf32>
    %c0_24 = arith.constant 0 : index
    %c0_25 = arith.constant 0 : index
    %45 = vector.load %arg7[%c0_24, %c0_25] : memref<2x128xf32, #tpu.memory_space<vmem>>, vector<1x128xf32>
    %46 = vector.broadcast %45 : vector<1x128xf32> to vector<128x128xf32>
    %47 = arith.addf %44, %46 : vector<128x128xf32>
    %cst_26 = arith.constant 0.000000e+00 : f32
    %48 = vector.broadcast %cst_26 : f32 to vector<128x128xf32>
    %49 = arith.cmpf ogt, %47, %48 : vector<128x128xf32>
    %50 = vector.broadcast %0 : f32 to vector<128x128xf32>
    %51 = arith.mulf %50, %47 : vector<128x128xf32>
    %52 = arith.select %49, %47, %51 : vector<128x128xi1>, vector<128x128xf32>
    %c0_27 = arith.constant 0 : index
    %c0_28 = arith.constant 0 : index
    %53 = vector.load %arg9[%c0_27, %c0_28] : memref<128x128xf32, #tpu.memory_space<vmem>>, vector<128x128xf32>
    tpu.vector_store %arg9[%c0_27, %c0_28], %52 {strides = array<i32>} : memref<128x128xf32, #tpu.memory_space<vmem>>, vector<128x128xf32>,
    %54 = vector.extract_strided_slice %14 {offsets = [0, 1], sizes = [128, 1], strides = [1, 1]} : vector<128x2xf32> to vector<128x1xf32>
    %55 = vector.extract_strided_slice %12 {offsets = [1, 0], sizes = [1, 256], strides = [1, 1]} : vector<2x256xf32> to vector<1x256xf32>
    %56 = vector.broadcast %54 : vector<128x1xf32> to vector<128x256xf32>
    %57 = vector.broadcast %55 : vector<1x256xf32> to vector<128x256xf32>
    %58 = arith.addf %56, %57 : vector<128x256xf32>
    %cst_29 = arith.constant 0.000000e+00 : f32
    %59 = vector.broadcast %cst_29 : f32 to vector<128x256xf32>
    %60 = arith.cmpf ogt, %58, %59 : vector<128x256xf32>
    %cst_30 = arith.constant 2.000000e-01 : f32
    %61 = vector.broadcast %cst_30 : f32 to vector<128x256xf32>
    %62 = arith.mulf %61, %58 : vector<128x256xf32>
    %63 = arith.select %60, %58, %62 : vector<128x256xi1>, vector<128x256xf32>
    %cst_31 = arith.constant 0xFF800000 : f32
    %64 = vector.broadcast %cst_31 : f32 to vector<128x256xf32>
    %65 = arith.select %17, %63, %64 : vector<128x256xi1>, vector<128x256xf32>
    %cst_32 = arith.constant dense<0xFF800000> : vector<128xf32>
    %66 = vector.multi_reduction <maximumf>, %65, %cst_32 [1] : vector<128x256xf32> to vector<128xf32>
    %67 = vector.shape_cast %66 : vector<128xf32> to vector<128x1xf32>
    %68 = vector.broadcast %67 : vector<128x1xf32> to vector<128x256xf32>
    %69 = arith.subf %63, %68 : vector<128x256xf32>
    %70 = math.exp %69 : vector<128x256xf32>
    %cst_33 = arith.constant 0.000000e+00 : f32
    %71 = vector.broadcast %cst_33 : f32 to vector<128x256xf32>
    %72 = arith.select %17, %70, %71 : vector<128x256xi1>, vector<128x256xf32>
    %73 = arith.truncf %72 : vector<128x256xf32> to vector<128x256xbf16>
    %74 = vector.extract_strided_slice %5 {offsets = [0, 128], sizes = [256, 128], strides = [1, 1]} : vector<256x256xbf16> to vector<256x128xbf16>
    %cst_34 = arith.constant dense<0.000000e+00> : vector<128x128xf32>
    %75 = tpu.matmul %73, %74, %cst_34 {dimension_numbers = #tpu.dot_dimension_numbers<[1], [0], [0], [1], [0, 0, 1, 1], [], []>} : vector<128x256xbf16>, vector<256x128xbf16>, vector<128x128xf32> -> vector<128x128xf32>
    %cst_35 = arith.constant dense<0.000000e+00> : vector<128xf32>
    %76 = vector.multi_reduction <add>, %72, %cst_35 [1] : vector<128x256xf32> to vector<128xf32>
    %77 = vector.shape_cast %76 : vector<128xf32> to vector<128x1xf32>
    %78 = tpu.reciprocal %77 {approx = true} : vector<128x1xf32> -> vector<128x1xf32>
    %79 = vector.broadcast %78 : vector<128x1xf32> to vector<128x128xf32>
    %80 = arith.mulf %75, %79 : vector<128x128xf32>
    %c1 = arith.constant 1 : index
    %c0_36 = arith.constant 0 : index
    %81 = vector.load %arg7[%c1, %c0_36] : memref<2x128xf32, #tpu.memory_space<vmem>>, vector<1x128xf32>
    %82 = vector.broadcast %81 : vector<1x128xf32> to vector<128x128xf32>
    %83 = arith.addf %80, %82 : vector<128x128xf32>
    %cst_37 = arith.constant 0.000000e+00 : f32
    %84 = vector.broadcast %cst_37 : f32 to vector<128x128xf32>
    %85 = arith.cmpf ogt, %83, %84 : vector<128x128xf32>
    %86 = vector.broadcast %0 : f32 to vector<128x128xf32>
    %87 = arith.mulf %86, %83 : vector<128x128xf32>
    %88 = arith.select %85, %83, %87 : vector<128x128xi1>, vector<128x128xf32>
    %c0_38 = arith.constant 0 : index
    %c0_39 = arith.constant 0 : index
    %89 = vector.load %arg10[%c0_38, %c0_39] : memref<128x128xf32, #tpu.memory_space<vmem>>, vector<128x128xf32>
    tpu.vector_store %arg10[%c0_38, %c0_39], %88 {strides = array<i32>} : memref<128x128xf32, #tpu.memory_space<vmem>>, vector<128x128xf32>,
    return
  }
  func.func @transform_0(%arg0: i32) -> (i32, i32) {
    %c0_i32 = arith.constant 0 : i32
    %c0_i32_0 = arith.constant 0 : i32
    %c0_i32_1 = arith.constant 0 : i32
    return %c0_i32, %c0_i32_0 : i32, i32
  }
  func.func @transform_1(%arg0: i32) -> (i32, i32) {
    %c0_i32 = arith.constant 0 : i32
    %c0_i32_0 = arith.constant 0 : i32
    return %arg0, %c0_i32 : i32, i32
  }
  func.func @transform_2(%arg0: i32) -> (i32, i32) {
    %c0_i32 = arith.constant 0 : i32
    %c0_i32_0 = arith.constant 0 : i32
    return %arg0, %c0_i32 : i32, i32
  }
  func.func @transform_3(%arg0: i32) -> (i32, i32) {
    %c0_i32 = arith.constant 0 : i32
    %c0_i32_0 = arith.constant 0 : i32
    %c0_i32_1 = arith.constant 0 : i32
    return %c0_i32, %c0_i32_0 : i32, i32
  }
  func.func @transform_4(%arg0: i32) -> (i32, i32) {
    %c0_i32 = arith.constant 0 : i32
    %c0_i32_0 = arith.constant 0 : i32
    %c0_i32_1 = arith.constant 0 : i32
    return %c0_i32, %c0_i32_0 : i32, i32
  }
  func.func @transform_5(%arg0: i32) -> (i32, i32) {
    %c0_i32 = arith.constant 0 : i32
    %c0_i32_0 = arith.constant 0 : i32
    %c0_i32_1 = arith.constant 0 : i32
    return %c0_i32, %c0_i32_0 : i32, i32
  }
  func.func @transform_6(%arg0: i32) -> (i32, i32) {
    %c0_i32 = arith.constant 0 : i32
    %c0_i32_0 = arith.constant 0 : i32
    %c0_i32_1 = arith.constant 0 : i32
    return %c0_i32, %c0_i32_0 : i32, i32
  }
  func.func @transform_7(%arg0: i32) -> i32 {
    %c0_i32 = arith.constant 0 : i32
    %c0_i32_0 = arith.constant 0 : i32
    return %c0_i32 : i32
  }
  func.func @transform_8(%arg0: i32) -> (i32, i32) {
    %c0_i32 = arith.constant 0 : i32
    %c0_i32_0 = arith.constant 0 : i32
    return %arg0, %c0_i32 : i32, i32
  }
  func.func @transform_9(%arg0: i32) -> (i32, i32) {
    %c0_i32 = arith.constant 0 : i32
    %c0_i32_0 = arith.constant 0 : i32
    return %arg0, %c0_i32 : i32, i32
  }
}

</mosaic_0001>

<llo_original>
// kernel: tpu_custom_call.1
$region0: #{tpu_custom_call.1}
  #allocation0 [shape = 'u32[]', space=smem, size = 0x4, offset = 0x4, fixed_abs, tag = 'smem constant byte address 0x4 - core index']
  #allocation1 [shape = 'u32[144,128]{1,0:T(1,128)}', space=vmem, size = 0x12000, scoped, tag = 'internal scratch']
  #allocation2 [shape = 'f32[1]{0:T(128)S(6)}', space=smem, size = 0x200, scoped, tag = 'scoped memory for tpu_custom_call.1']
  %s0 = inlined_call_operand.vmem [shape: f32[256,64], index: 0, kind: input, shape index: {}]
  %s1 = inlined_call_operand.vmem [shape: f32[256,64], index: 1, kind: input, shape index: {}]
  %s2 = inlined_call_operand.vmem [shape: s8[256,256], index: 2, kind: input, shape index: {}]
  %s3 = inlined_call_operand.vmem [shape: bf16[64,256], index: 3, kind: input, shape index: {}]
  %s4 = inlined_call_operand.vmem [shape: bf16[2,256], index: 4, kind: input, shape index: {}]
  %s5 = inlined_call_operand.vmem [shape: bf16[2,256], index: 5, kind: input, shape index: {}]
  %s6 = inlined_call_operand.vmem [shape: f32[2,128], index: 6, kind: input, shape index: {}]
  %s7 = inlined_call_operand.<no memory space> [shape: f32[1], index: 7, kind: input, shape index: {}]
  %s8 = inlined_call_operand.hbm [shape: f32[256,128], index: 8, kind: output, shape index: {0}]
  %s9 = inlined_call_operand.hbm [shape: f32[256,128], index: 9, kind: output, shape index: {1}]
  %10 = xla_tuple %s8, %s9
  %s11 = sld [smem:[#allocation0]]
  $region73: #{tpu_custom_call.1} parent=0
    _
  %s13 = ssub.s32 1, %s11
  %s14 = scalar_select 0, %s13, %s11
  %15 = sst [smem:[#allocation2]] %s7
  $region1: #{tpu_custom_call.1} parent=0
    #allocation3 [shape = 'u8[131072]{0}', space=vmem, size = 0x20000, scoped, tag = 'output window, operand 0']
    #allocation4 [shape = 's32[2]{0}', space=sflag, size = 0x8, scoped, tag = 'scoped memory for tpu_custom_call.1']
    #allocation5 [shape = 'u8[131072]{0}', space=vmem, size = 0x20000, scoped, tag = 'output window, operand 1']
    #allocation6 [shape = 's32[2]{0}', space=sflag, size = 0x8, scoped, tag = 'scoped memory for tpu_custom_call.1']
    %16 = vsyncpa [#allocation4], 0
    %s17 = scalar_lea.sflag [#allocation4], 1
    %18 = vsyncpa %s17, 0
    %19 = vsyncpa [#allocation6], 0
    %s20 = scalar_lea.sflag [#allocation6], 1
    %21 = vsyncpa %s20, 0
    loop: start=0, step=1, limit=4
    $region2: #{tpu_custom_call.1} parent=1 // loop_pre_header
      _
    $region3: #{tpu_custom_call.1} parent=1 // loop_header
      %s23 = sphi 0, %s27
      %p24 = scmp.ge.s32.totalorder %s23, 4
      %s31 = sphi 0, %s31
      %s33 = sphi 0, %s31
      %s34 = sphi 0, %s33
      %s48 = sphi 0, %s34
      %s54 = sphi 0, %s56
      %s57 = sphi 0, %s54
      %s58 = sphi 0, %s57
      %s74 = sphi 0, %s58
      %s80 = sphi 0, %s82
      %s83 = sphi 0, %s80
      %s84 = sphi 0, %s83
      %s100 = sphi 0, %s84
      %s104 = sphi 0, %s104
      %s106 = sphi 0, %s104
      %s107 = sphi 0, %s106
      %s121 = sphi 0, %s107
      %s125 = sphi 0, %s125
      %s127 = sphi 0, %s125
      %s128 = sphi 0, %s127
      %s142 = sphi 0, %s128
      %s146 = sphi 0, %s146
      %s148 = sphi 0, %s146
      %s149 = sphi 0, %s148
      %s163 = sphi 0, %s149
      %s167 = sphi 0, %s167
      %s169 = sphi 0, %s167
      %s170 = sphi 0, %s169
      %s184 = sphi 0, %s170
      %s188 = sphi 0, %s188
      %s190 = sphi 0, %s188
      %s191 = sphi 0, %s190
      %s205 = sphi 0, %s191
      %s211 = sphi 0, %s213
      %s214 = sphi 0, %s211
      %s215 = sphi 0, %s214
      %s231 = sphi 0, %s215
      %s237 = sphi 0, %s239
      %s240 = sphi 0, %s237
      %s241 = sphi 0, %s240
      %s257 = sphi 0, %s241
    $region4: #{tpu_custom_call.1} parent=1 // loop_header_branch
      %26 = sbr.rel (%p24) target = $region8
    $region5: #{tpu_custom_call.1} parent=1 // loop_body
      %s28 = ssub.s32 %s23, 1
      %s29 = ssub.s32 %s23, 2
      %s30 = sadd.s32 %s23, 1
      %s32 = sadd.s32 %s31, 1
      %p35 = scmp.eq.s32.totalorder %s23, 1
      %p36 = scmp.ne.s32.totalorder %s31, %s33
      %p37 = scmp.eq.s32.totalorder %s23, 0
      %p38 = por %p36, %p37
      %p39 = scmp.ne.s32.totalorder %s31, %s33
      %p40 = scmp.eq.s32.totalorder %s28, 1
      %p41 = por %p39, %p40
      %p42 = scmp.ne.s32.totalorder %s33, %s34
      %p43 = scmp.eq.s32.totalorder %s28, 0
      %p44 = por %p42, %p43
      %p45 = scmp.ne.s32.totalorder %s33, %s34
      %p46 = scmp.eq.s32.totalorder %s29, 1
      %p47 = por %p45, %p46
      %p49 = scmp.ne.s32.totalorder %s34, %s48
      %p50 = scmp.eq.s32.totalorder %s29, 0
      %p51 = por %p49, %p50
      %s52 = ssub.s32 %s23, %s30
      %p53 = scmp.eq.s32.totalorder %s52, 0
      %s55 = sadd.s32 %s54, 1
      %s56 = scalar_select %p53, %s54, %s55
      %p59 = pneg %p53
      %p60 = scmp.eq.s32.totalorder %s23, 1
      %p61 = por %p59, %p60
      %p62 = scmp.ne.s32.totalorder %s54, %s57
      %p63 = scmp.eq.s32.totalorder %s23, 0
      %p64 = por %p62, %p63
      %p65 = scmp.ne.s32.totalorder %s54, %s57
      %p66 = scmp.eq.s32.totalorder %s28, 1
      %p67 = por %p65, %p66
      %p68 = scmp.ne.s32.totalorder %s57, %s58
      %p69 = scmp.eq.s32.totalorder %s28, 0
      %p70 = por %p68, %p69
      %p71 = scmp.ne.s32.totalorder %s57, %s58
      %p72 = scmp.eq.s32.totalorder %s29, 1
      %p73 = por %p71, %p72
      %p75 = scmp.ne.s32.totalorder %s58, %s74
      %p76 = scmp.eq.s32.totalorder %s29, 0
      %p77 = por %p75, %p76
      %s78 = ssub.s32 %s23, %s30
      %p79 = scmp.eq.s32.totalorder %s78, 0
      %s81 = sadd.s32 %s80, 1
      %s82 = scalar_select %p79, %s80, %s81
      %p85 = pneg %p79
      %p86 = scmp.eq.s32.totalorder %s23, 1
      %p87 = por %p85, %p86
      %p88 = scmp.ne.s32.totalorder %s80, %s83
      %p89 = scmp.eq.s32.totalorder %s23, 0
      %p90 = por %p88, %p89
      %p91 = scmp.ne.s32.totalorder %s80, %s83
      %p92 = scmp.eq.s32.totalorder %s28, 1
      %p93 = por %p91, %p92
      %p94 = scmp.ne.s32.totalorder %s83, %s84
      %p95 = scmp.eq.s32.totalorder %s28, 0
      %p96 = por %p94, %p95
      %p97 = scmp.ne.s32.totalorder %s83, %s84
      %p98 = scmp.eq.s32.totalorder %s29, 1
      %p99 = por %p97, %p98
      %p101 = scmp.ne.s32.totalorder %s84, %s100
      %p102 = scmp.eq.s32.totalorder %s29, 0
      %p103 = por %p101, %p102
      %s105 = sadd.s32 %s104, 1
      %p108 = scmp.eq.s32.totalorder %s23, 1
      %p109 = scmp.ne.s32.totalorder %s104, %s106
      %p110 = scmp.eq.s32.totalorder %s23, 0
      %p111 = por %p109, %p110
      %p112 = scmp.ne.s32.totalorder %s104, %s106
      %p113 = scmp.eq.s32.totalorder %s28, 1
      %p114 = por %p112, %p113
      %p115 = scmp.ne.s32.totalorder %s106, %s107
      %p116 = scmp.eq.s32.totalorder %s28, 0
      %p117 = por %p115, %p116
      %p118 = scmp.ne.s32.totalorder %s106, %s107
      %p119 = scmp.eq.s32.totalorder %s29, 1
      %p120 = por %p118, %p119
      %p122 = scmp.ne.s32.totalorder %s107, %s121
      %p123 = scmp.eq.s32.totalorder %s29, 0
      %p124 = por %p122, %p123
      %s126 = sadd.s32 %s125, 1
      %p129 = scmp.eq.s32.totalorder %s23, 1
      %p130 = scmp.ne.s32.totalorder %s125, %s127
      %p131 = scmp.eq.s32.totalorder %s23, 0
      %p132 = por %p130, %p131
      %p133 = scmp.ne.s32.totalorder %s125, %s127
      %p134 = scmp.eq.s32.totalorder %s28, 1
      %p135 = por %p133, %p134
      %p136 = scmp.ne.s32.totalorder %s127, %s128
      %p137 = scmp.eq.s32.totalorder %s28, 0
      %p138 = por %p136, %p137
      %p139 = scmp.ne.s32.totalorder %s127, %s128
      %p140 = scmp.eq.s32.totalorder %s29, 1
      %p141 = por %p139, %p140
      %p143 = scmp.ne.s32.totalorder %s128, %s142
      %p144 = scmp.eq.s32.totalorder %s29, 0
      %p145 = por %p143, %p144
      %s147 = sadd.s32 %s146, 1
      %p150 = scmp.eq.s32.totalorder %s23, 1
      %p151 = scmp.ne.s32.totalorder %s146, %s148
      %p152 = scmp.eq.s32.totalorder %s23, 0
      %p153 = por %p151, %p152
      %p154 = scmp.ne.s32.totalorder %s146, %s148
      %p155 = scmp.eq.s32.totalorder %s28, 1
      %p156 = por %p154, %p155
      %p157 = scmp.ne.s32.totalorder %s148, %s149
      %p158 = scmp.eq.s32.totalorder %s28, 0
      %p159 = por %p157, %p158
      %p160 = scmp.ne.s32.totalorder %s148, %s149
      %p161 = scmp.eq.s32.totalorder %s29, 1
      %p162 = por %p160, %p161
      %p164 = scmp.ne.s32.totalorder %s149, %s163
      %p165 = scmp.eq.s32.totalorder %s29, 0
      %p166 = por %p164, %p165
      %s168 = sadd.s32 %s167, 1
      %p171 = scmp.eq.s32.totalorder %s23, 1
      %p172 = scmp.ne.s32.totalorder %s167, %s169
      %p173 = scmp.eq.s32.totalorder %s23, 0
      %p174 = por %p172, %p173
      %p175 = scmp.ne.s32.totalorder %s167, %s169
      %p176 = scmp.eq.s32.totalorder %s28, 1
      %p177 = por %p175, %p176
      %p178 = scmp.ne.s32.totalorder %s169, %s170
      %p179 = scmp.eq.s32.totalorder %s28, 0
      %p180 = por %p178, %p179
      %p181 = scmp.ne.s32.totalorder %s169, %s170
      %p182 = scmp.eq.s32.totalorder %s29, 1
      %p183 = por %p181, %p182
      %p185 = scmp.ne.s32.totalorder %s170, %s184
      %p186 = scmp.eq.s32.totalorder %s29, 0
      %p187 = por %p185, %p186
      %s189 = sadd.s32 %s188, 1
      %p192 = scmp.eq.s32.totalorder %s23, 1
      %p193 = scmp.ne.s32.totalorder %s188, %s190
      %p194 = scmp.eq.s32.totalorder %s23, 0
      %p195 = por %p193, %p194
      %p196 = scmp.ne.s32.totalorder %s188, %s190
      %p197 = scmp.eq.s32.totalorder %s28, 1
      %p198 = por %p196, %p197
      %p199 = scmp.ne.s32.totalorder %s190, %s191
      %p200 = scmp.eq.s32.totalorder %s28, 0
      %p201 = por %p199, %p200
      %p202 = scmp.ne.s32.totalorder %s190, %s191
      %p203 = scmp.eq.s32.totalorder %s29, 1
      %p204 = por %p202, %p203
      %p206 = scmp.ne.s32.totalorder %s191, %s205
      %p207 = scmp.eq.s32.totalorder %s29, 0
      %p208 = por %p206, %p207
      %s209 = ssub.s32 %s23, %s30
      %p210 = scmp.eq.s32.totalorder %s209, 0
      %s212 = sadd.s32 %s211, 1
      %s213 = scalar_select %p210, %s211, %s212
      %p216 = pneg %p210
      %p217 = scmp.eq.s32.totalorder %s23, 1
      %p218 = por %p216, %p217
      %p219 = scmp.ne.s32.totalorder %s211, %s214
      %p220 = scmp.eq.s32.totalorder %s23, 0
      %p221 = por %p219, %p220
      %p222 = scmp.ne.s32.totalorder %s211, %s214
      %p223 = scmp.eq.s32.totalorder %s28, 1
      %p224 = por %p222, %p223
      %p225 = scmp.ne.s32.totalorder %s214, %s215
      %p226 = scmp.eq.s32.totalorder %s28, 0
      %p227 = por %p225, %p226
      %p228 = scmp.ne.s32.totalorder %s214, %s215
      %p229 = scmp.eq.s32.totalorder %s29, 1
      %p230 = por %p228, %p229
      %p232 = scmp.ne.s32.totalorder %s215, %s231
      %p233 = scmp.eq.s32.totalorder %s29, 0
      %p234 = por %p232, %p233
      %s235 = ssub.s32 %s23, %s30
      %p236 = scmp.eq.s32.totalorder %s235, 0
      %s238 = sadd.s32 %s237, 1
      %s239 = scalar_select %p236, %s237, %s238
      %p242 = pneg %p236
      %p243 = scmp.eq.s32.totalorder %s23, 1
      %p244 = por %p242, %p243
      %p245 = scmp.ne.s32.totalorder %s237, %s240
      %p246 = scmp.eq.s32.totalorder %s23, 0
      %p247 = por %p245, %p246
      %p248 = scmp.ne.s32.totalorder %s237, %s240
      %p249 = scmp.eq.s32.totalorder %s28, 1
      %p250 = por %p248, %p249
      %p251 = scmp.ne.s32.totalorder %s240, %s241
      %p252 = scmp.eq.s32.totalorder %s28, 0
      %p253 = por %p251, %p252
      %p254 = scmp.ne.s32.totalorder %s240, %s241
      %p255 = scmp.eq.s32.totalorder %s29, 1
      %p256 = por %p254, %p255
      %p258 = scmp.ne.s32.totalorder %s241, %s257
      %p259 = scmp.eq.s32.totalorder %s29, 0
      %p260 = por %p258, %p259
      %p261 = scmp.le.s32.totalorder 1, %s23
      %p262 = scmp.lt.s32.totalorder %s23, 3
      %p263 = pnand %p261, %p262
      %p264 = pneg %p263
      // Predicated region
      $region9: #{tpu_custom_call.1} parent=5 // pred_check
        _
      $region10: #{tpu_custom_call.1} parent=5 // pred_check_branch
        %266 = sbr.rel (%p263) target = $region12
      $region11: #{tpu_custom_call.1} parent=5 // pred_region
        %s267 = ssub.s32 %s23, 1
        // Predicated region
        $region13: #{tpu_custom_call.1} parent=11 // pred_check
          %p268 = pneg %p44
        $region14: #{tpu_custom_call.1} parent=11 // pred_check_branch
          %270 = sbr.rel (%p268) target = $region16
        $region15: #{tpu_custom_call.1} parent=11 // pred_region
          _
        $region16: #{tpu_custom_call.1} parent=11 // pred_fallthru
          _
        // Predicated region
        $region17: #{tpu_custom_call.1} parent=11 // pred_check
          %p271 = pneg %p117
        $region18: #{tpu_custom_call.1} parent=11 // pred_check_branch
          %273 = sbr.rel (%p271) target = $region20
        $region19: #{tpu_custom_call.1} parent=11 // pred_region
          _
        $region20: #{tpu_custom_call.1} parent=11 // pred_fallthru
          _
        // Predicated region
        $region21: #{tpu_custom_call.1} parent=11 // pred_check
          %p274 = pneg %p138
        $region22: #{tpu_custom_call.1} parent=11 // pred_check_branch
          %276 = sbr.rel (%p274) target = $region24
        $region23: #{tpu_custom_call.1} parent=11 // pred_region
          _
        $region24: #{tpu_custom_call.1} parent=11 // pred_fallthru
          _
        // Predicated region
        $region25: #{tpu_custom_call.1} parent=11 // pred_check
          %p277 = pneg %p159
        $region26: #{tpu_custom_call.1} parent=11 // pred_check_branch
          %279 = sbr.rel (%p277) target = $region28
        $region27: #{tpu_custom_call.1} parent=11 // pred_region
          _
        $region28: #{tpu_custom_call.1} parent=11 // pred_fallthru
          _
        // Predicated region
        $region29: #{tpu_custom_call.1} parent=11 // pred_check
          %p280 = pneg %p180
        $region30: #{tpu_custom_call.1} parent=11 // pred_check_branch
          %282 = sbr.rel (%p280) target = $region32
        $region31: #{tpu_custom_call.1} parent=11 // pred_region
          _
        $region32: #{tpu_custom_call.1} parent=11 // pred_fallthru
          _
        // Predicated region
        $region33: #{tpu_custom_call.1} parent=11 // pred_check
          %p283 = pneg %p201
        $region34: #{tpu_custom_call.1} parent=11 // pred_check_branch
          %285 = sbr.rel (%p283) target = $region36
        $region35: #{tpu_custom_call.1} parent=11 // pred_region
          _
        $region36: #{tpu_custom_call.1} parent=11 // pred_fallthru
          _
      $region12: #{tpu_custom_call.1} parent=5 // pred_fallthru
        _
      %p286 = scmp.lt.s32.totalorder %s23, 2
      // Predicated region
      $region37: #{tpu_custom_call.1} parent=5 // pred_check
        %p287 = pneg %p286
      $region38: #{tpu_custom_call.1} parent=5 // pred_check_branch
        %289 = sbr.rel (%p287) target = $region40
      $region39: #{tpu_custom_call.1} parent=5 // pred_region
        // Predicated region
        $region41: #{tpu_custom_call.1} parent=39 // pred_check
          %p290 = pneg %p64
        $region42: #{tpu_custom_call.1} parent=39 // pred_check_branch
          %292 = sbr.rel (%p290) target = $region44
        $region43: #{tpu_custom_call.1} parent=39 // pred_region
          %s293 = smul.u32 16, %s23
          %p294 = scmp.lt.s32.totalorder %s293, 31
          %s295 = scalar_select %p294, %s293, 31
          %s296 = smul.addr %s295, 8
          %s297 = scalar_lea.vmem %s1, %s296
          %s298 = smul.u32 16, %s23
        $region44: #{tpu_custom_call.1} parent=39 // pred_fallthru
          _
        // Predicated region
        $region45: #{tpu_custom_call.1} parent=39 // pred_check
          %p299 = pneg %p90
        $region46: #{tpu_custom_call.1} parent=39 // pred_check_branch
          %301 = sbr.rel (%p299) target = $region48
        $region47: #{tpu_custom_call.1} parent=39 // pred_region
          %s302 = smul.u32 4, %s23
          %p303 = scmp.lt.s32.totalorder %s302, 7
          %s304 = scalar_select %p303, %s302, 7
          %s305 = smul.addr %s304, 2
          %s306 = smul.addr %s305, 8
          %s307 = scalar_lea.vmem %s2, %s306
          %s308 = smul.u32 4, %s23
        $region48: #{tpu_custom_call.1} parent=39 // pred_fallthru
          _
      $region40: #{tpu_custom_call.1} parent=5 // pred_fallthru
        _
      %p309 = scmp.le.s32.totalorder 1, %s23
      %p310 = scmp.lt.s32.totalorder %s23, 3
      %p311 = pnand %p309, %p310
      %p312 = pneg %p311
      // Predicated region
      $region49: #{tpu_custom_call.1} parent=5 // pred_check
        _
      $region50: #{tpu_custom_call.1} parent=5 // pred_check_branch
        %314 = sbr.rel (%p311) target = $region52
      $region51: #{tpu_custom_call.1} parent=5 // pred_region
        %s315 = ssub.s32 %s23, 1
        %p316 = pneg %p44
        %p317 = pneg %p41
        %s318 = smul.u32 16, %s28
        %p319 = scmp.lt.s32.totalorder %s318, 31
        %s320 = scalar_select %p319, %s318, 31
        %s321 = smul.addr %s320, 8
        %s322 = scalar_lea.vmem %s1, %s321
        %p323 = pneg %p70
        %p324 = pneg %p67
        %s325 = smul.u32 4, %s28
        %p326 = scmp.lt.s32.totalorder %s325, 7
        %s327 = scalar_select %p326, %s325, 7
        %s328 = smul.addr %s327, 2
        %s329 = smul.addr %s328, 8
        %s330 = scalar_lea.vmem %s2, %s329
        %p331 = pneg %p96
        %p332 = pneg %p93
        %p333 = pneg %p117
        %p334 = pneg %p114
        %p335 = pneg %p138
        %p336 = pneg %p135
        %p337 = pneg %p159
        %p338 = pneg %p156
        %p339 = pneg %p180
        %p340 = pneg %p177
        %p341 = pneg %p201
        %p342 = pneg %p198
        %p343 = pneg %p227
        %p344 = pneg %p224
        %s345 = sand.u32 %s214, 1
        %s346 = scalar_lea.sflag [#allocation4], %s345
        %s347 = sand.u32 %s214, 1
        %s348 = smul.addr %s347, 128
        %s349 = scalar_lea.vmem [#allocation3], %s348
        %p350 = pneg %p253
        %p351 = pneg %p250
        %s352 = sand.u32 %s240, 1
        %s353 = scalar_lea.sflag [#allocation6], %s352
        %s354 = sand.u32 %s240, 1
        %s355 = smul.addr %s354, 128
        %s356 = scalar_lea.vmem [#allocation5], %s355
        %s357 = smul.u32 16, %s28
        %p358 = scmp.lt.s32.totalorder %s357, 31
        %s359 = scalar_select %p358, %s357, 31
        %s360 = smul.addr %s359, 8
        %s361 = scalar_lea.vmem %s1, %s360
        %s362 = smul.u32 16, %s28
        %s363 = smul.u32 4, %s28
        %p364 = scmp.lt.s32.totalorder %s363, 7
        %s365 = scalar_select %p364, %s363, 7
        %s366 = smul.addr %s365, 2
        %s367 = smul.addr %s366, 8
        %s368 = scalar_lea.vmem %s2, %s367
        %s369 = smul.u32 4, %s28
        %s370 = smul.u32 16, %s28
        %s371 = smul.u32 16, %s28
        %s375 = sld [smem:[#allocation2]]
        %v376 = vld [vmem:[%s0] sm:$0xff]
        %v377 = vld [vmem:[%s0 + $0x8] sm:$0xff]
        %v378 = vld [vmem:[%s0 + $0x10] sm:$0xff]
        %v379 = vld [vmem:[%s0 + $0x18] sm:$0xff]
        %v380 = vld [vmem:[%s0 + $0x20] sm:$0xff]
        %v381 = vld [vmem:[%s0 + $0x28] sm:$0xff]
        %v382 = vld [vmem:[%s0 + $0x30] sm:$0xff]
        %v383 = vld [vmem:[%s0 + $0x38] sm:$0xff]
        %v384 = vld [vmem:[%s0 + $0x40] sm:$0xff]
        %v385 = vld [vmem:[%s0 + $0x48] sm:$0xff]
        %v386 = vld [vmem:[%s0 + $0x50] sm:$0xff]
        %v387 = vld [vmem:[%s0 + $0x58] sm:$0xff]
        %v388 = vld [vmem:[%s0 + $0x60] sm:$0xff]
        %v389 = vld [vmem:[%s0 + $0x68] sm:$0xff]
        %v390 = vld [vmem:[%s0 + $0x70] sm:$0xff]
        %v391 = vld [vmem:[%s0 + $0x78] sm:$0xff]
        %v392 = vld [vmem:[%s0 + $0x80] sm:$0xff]
        %v393 = vld [vmem:[%s0 + $0x88] sm:$0xff]
        %v394 = vld [vmem:[%s0 + $0x90] sm:$0xff]
        %v395 = vld [vmem:[%s0 + $0x98] sm:$0xff]
        %v396 = vld [vmem:[%s0 + $0xa0] sm:$0xff]
        %v397 = vld [vmem:[%s0 + $0xa8] sm:$0xff]
        %v398 = vld [vmem:[%s0 + $0xb0] sm:$0xff]
        %v399 = vld [vmem:[%s0 + $0xb8] sm:$0xff]
        %v400 = vld [vmem:[%s0 + $0xc0] sm:$0xff]
        %v401 = vld [vmem:[%s0 + $0xc8] sm:$0xff]
        %v402 = vld [vmem:[%s0 + $0xd0] sm:$0xff]
        %v403 = vld [vmem:[%s0 + $0xd8] sm:$0xff]
        %v404 = vld [vmem:[%s0 + $0xe0] sm:$0xff]
        %v405 = vld [vmem:[%s0 + $0xe8] sm:$0xff]
        %v406 = vld [vmem:[%s0 + $0xf0] sm:$0xff]
        %v407 = vld [vmem:[%s0 + $0xf8] sm:$0xff]
        %v408 = vpack.c.bf16 %v377, %v376
        %v409 = vpack.c.bf16 %v379, %v378
        %v410 = vpack.c.bf16 %v381, %v380
        %v411 = vpack.c.bf16 %v383, %v382
        %v412 = vpack.c.bf16 %v385, %v384
        %v413 = vpack.c.bf16 %v387, %v386
        %v414 = vpack.c.bf16 %v389, %v388
        %v415 = vpack.c.bf16 %v391, %v390
        %v416 = vpack.c.bf16 %v393, %v392
        %v417 = vpack.c.bf16 %v395, %v394
        %v418 = vpack.c.bf16 %v397, %v396
        %v419 = vpack.c.bf16 %v399, %v398
        %v420 = vpack.c.bf16 %v401, %v400
        %v421 = vpack.c.bf16 %v403, %v402
        %v422 = vpack.c.bf16 %v405, %v404
        %v423 = vpack.c.bf16 %v407, %v406
        %v424 = vld [vmem:[%s3] sm:$0xff]
        %v425 = vld [vmem:[%s3 + $0x8] sm:$0xff]
        %v426 = vld [vmem:[%s3 + $0x10] sm:$0xff]
        %v427 = vld [vmem:[%s3 + $0x18] sm:$0xff]
        %v428 = vld [vmem:[%s3 + $0x20] sm:$0xff]
        %v429 = vld [vmem:[%s3 + $0x28] sm:$0xff]
        %v430 = vld [vmem:[%s3 + $0x30] sm:$0xff]
        %v431 = vld [vmem:[%s3 + $0x38] sm:$0xff]
        %v440 = vunpack.c.l.b16 %v424
        %v441 = vunpack.c.h.b16 %v424
        %v442 = vunpack.c.l.b16 %v425
        %v443 = vunpack.c.h.b16 %v425
        %v444 = vunpack.c.l.b16 %v426
        %v445 = vunpack.c.h.b16 %v426
        %v446 = vunpack.c.l.b16 %v427
        %v447 = vunpack.c.h.b16 %v427
        %v448 = vunpack.c.l.b16 %v428
        %v449 = vunpack.c.h.b16 %v428
        %v450 = vunpack.c.l.b16 %v429
        %v451 = vunpack.c.h.b16 %v429
        %v452 = vunpack.c.l.b16 %v430
        %v453 = vunpack.c.h.b16 %v430
        %v454 = vunpack.c.l.b16 %v431
        %v455 = vunpack.c.h.b16 %v431
        %v456 = vpack.c.b16 %v442, %v440
        %v457 = vpack.c.b16 %v443, %v441
        %v458 = vpack.c.b16 %v446, %v444
        %v459 = vpack.c.b16 %v447, %v445
        %v460 = vpack.c.b16 %v450, %v448
        %v461 = vpack.c.b16 %v451, %v449
        %v462 = vpack.c.b16 %v454, %v452
        %v463 = vpack.c.b16 %v455, %v453
        %vm472 = vcmask 523264
        %v474 = vsel %vm472, %v408, 0
        %v477 = vsel %vm472, %v409, 0
        %v480 = vsel %vm472, %v410, 0
        %v483 = vsel %vm472, %v411, 0
        %v486 = vsel %vm472, %v412, 0
        %v489 = vsel %vm472, %v413, 0
        %v492 = vsel %vm472, %v414, 0
        %v495 = vsel %vm472, %v415, 0
        %v498 = vsel %vm472, %v416, 0
        %v501 = vsel %vm472, %v417, 0
        %v504 = vsel %vm472, %v418, 0
        %v507 = vsel %vm472, %v419, 0
        %v510 = vsel %vm472, %v420, 0
        %v513 = vsel %vm472, %v421, 0
        %v516 = vsel %vm472, %v422, 0
        %v519 = vsel %vm472, %v423, 0
        %521 = vmatprep.subr.bf16.mxu0 %v457
        %522 = vmatpush1.bf16.msra.mxu0 %v456
        %523 = vmatprep.subr.bf16.mxu0 %v459
        %524 = vmatpush1.bf16.msra.mxu0 %v458
        %525 = vmatprep.subr.bf16.mxu0 %v461
        %526 = vmatpush1.bf16.msra.mxu0 %v460
        %527 = vmatprep.subr.bf16.mxu0 %v463
        %528 = vmatpush1.bf16.msra.mxu0 %v462
        %529 = vmatprep.subr.bf16.mxu0 0
        %530 = vmatpush1.bf16.msra.mxu0 0
        %531 = vmatprep.subr.bf16.mxu0 0
        %532 = vmatpush1.bf16.msra.mxu0 0
        %533 = vmatprep.subr.bf16.mxu0 0
        %534 = vmatpush1.bf16.msra.mxu0 0
        %535 = vmatprep.subr.bf16.mxu0 0
        %536 = vmatpush1.bf16.msra.mxu0 0
        %537 = vmatprep.subr.bf16.mxu0 0
        %538 = vmatpush1.bf16.msra.mxu0 0
        %539 = vmatprep.subr.bf16.mxu0 0
        %540 = vmatpush1.bf16.msra.mxu0 0
        %541 = vmatprep.subr.bf16.mxu0 0
        %542 = vmatpush1.bf16.msra.mxu0 0
        %543 = vmatprep.subr.bf16.mxu0 0
        %544 = vmatpush1.bf16.msra.mxu0 0
        %545 = vmatprep.subr.bf16.mxu0 0
        %546 = vmatpush1.bf16.msra.mxu0 0
        %547 = vmatprep.subr.bf16.mxu0 0
        %548 = vmatpush1.bf16.msra.mxu0 0
        %549 = vmatprep.subr.bf16.mxu0 0
        %550 = vmatpush1.bf16.msra.mxu0 0
        %551 = vmatprep.subr.bf16.mxu0 0
        %552 = vmatpush1.bf16.msra.mxu0 0
        %553 = vmatprep.mubr.bf16.mxu0 0
        %554 = vmatmul.mubr.bf16.gmra.mrb[0].mxu0 %v474
        %v555 = vpop.f32.mrb[0].mxu0
        %v556 = vadd.f32 0.0, %v555
        %v557 = vpop.f32.mrb[0].mxu0
        %v558 = vadd.f32 0.0, %v557
        %v559 = vpop.f32.mrb[0].mxu0
        %v560 = vadd.f32 0.0, %v559
        %v561 = vpop.f32.mrb[0].mxu0
        %v562 = vadd.f32 0.0, %v561
        %563 = vmatprep.mubr.bf16.mxu0 0
        %564 = vmatmul.mubr.bf16.gmra.mrb[0].mxu0 %v477
        %v565 = vpop.f32.mrb[0].mxu0
        %v566 = vadd.f32 0.0, %v565
        %v567 = vpop.f32.mrb[0].mxu0
        %v568 = vadd.f32 0.0, %v567
        %v569 = vpop.f32.mrb[0].mxu0
        %v570 = vadd.f32 0.0, %v569
        %v571 = vpop.f32.mrb[0].mxu0
        %v572 = vadd.f32 0.0, %v571
        %573 = vmatprep.mubr.bf16.mxu0 0
        %574 = vmatmul.mubr.bf16.gmra.mrb[0].mxu0 %v480
        %v575 = vpop.f32.mrb[0].mxu0
        %v576 = vadd.f32 0.0, %v575
        %v577 = vpop.f32.mrb[0].mxu0
        %v578 = vadd.f32 0.0, %v577
        %v579 = vpop.f32.mrb[0].mxu0
        %v580 = vadd.f32 0.0, %v579
        %v581 = vpop.f32.mrb[0].mxu0
        %v582 = vadd.f32 0.0, %v581
        %583 = vmatprep.mubr.bf16.mxu0 0
        %584 = vmatmul.mubr.bf16.gmra.mrb[0].mxu0 %v483
        %v585 = vpop.f32.mrb[0].mxu0
        %v586 = vadd.f32 0.0, %v585
        %v587 = vpop.f32.mrb[0].mxu0
        %v588 = vadd.f32 0.0, %v587
        %v589 = vpop.f32.mrb[0].mxu0
        %v590 = vadd.f32 0.0, %v589
        %v591 = vpop.f32.mrb[0].mxu0
        %v592 = vadd.f32 0.0, %v591
        %593 = vmatprep.mubr.bf16.mxu0 0
        %594 = vmatmul.mubr.bf16.gmra.mrb[0].mxu0 %v486
        %v595 = vpop.f32.mrb[0].mxu0
        %v596 = vadd.f32 0.0, %v595
        %v597 = vpop.f32.mrb[0].mxu0
        %v598 = vadd.f32 0.0, %v597
        %v599 = vpop.f32.mrb[0].mxu0
        %v600 = vadd.f32 0.0, %v599
        %v601 = vpop.f32.mrb[0].mxu0
        %v602 = vadd.f32 0.0, %v601
        %603 = vmatprep.mubr.bf16.mxu0 0
        %604 = vmatmul.mubr.bf16.gmra.mrb[0].mxu0 %v489
        %v605 = vpop.f32.mrb[0].mxu0
        %v606 = vadd.f32 0.0, %v605
        %v607 = vpop.f32.mrb[0].mxu0
        %v608 = vadd.f32 0.0, %v607
        %v609 = vpop.f32.mrb[0].mxu0
        %v610 = vadd.f32 0.0, %v609
        %v611 = vpop.f32.mrb[0].mxu0
        %v612 = vadd.f32 0.0, %v611
        %613 = vmatprep.mubr.bf16.mxu0 0
        %614 = vmatmul.mubr.bf16.gmra.mrb[0].mxu0 %v492
        %v615 = vpop.f32.mrb[0].mxu0
        %v616 = vadd.f32 0.0, %v615
        %v617 = vpop.f32.mrb[0].mxu0
        %v618 = vadd.f32 0.0, %v617
        %v619 = vpop.f32.mrb[0].mxu0
        %v620 = vadd.f32 0.0, %v619
        %v621 = vpop.f32.mrb[0].mxu0
        %v622 = vadd.f32 0.0, %v621
        %623 = vmatprep.mubr.bf16.mxu0 0
        %624 = vmatmul.mubr.bf16.gmra.mrb[0].mxu0 %v495
        %v625 = vpop.f32.mrb[0].mxu0
        %v626 = vadd.f32 0.0, %v625
        %v627 = vpop.f32.mrb[0].mxu0
        %v628 = vadd.f32 0.0, %v627
        %v629 = vpop.f32.mrb[0].mxu0
        %v630 = vadd.f32 0.0, %v629
        %v631 = vpop.f32.mrb[0].mxu0
        %v632 = vadd.f32 0.0, %v631
        %633 = vmatprep.mubr.bf16.mxu0 0
        %634 = vmatmul.mubr.bf16.gmra.mrb[0].mxu0 %v498
        %v635 = vpop.f32.mrb[0].mxu0
        %v636 = vadd.f32 0.0, %v635
        %v637 = vpop.f32.mrb[0].mxu0
        %v638 = vadd.f32 0.0, %v637
        %v639 = vpop.f32.mrb[0].mxu0
        %v640 = vadd.f32 0.0, %v639
        %v641 = vpop.f32.mrb[0].mxu0
        %v642 = vadd.f32 0.0, %v641
        %643 = vmatprep.mubr.bf16.mxu0 0
        %644 = vmatmul.mubr.bf16.gmra.mrb[0].mxu0 %v501
        %v645 = vpop.f32.mrb[0].mxu0
        %v646 = vadd.f32 0.0, %v645
        %v647 = vpop.f32.mrb[0].mxu0
        %v648 = vadd.f32 0.0, %v647
        %v649 = vpop.f32.mrb[0].mxu0
        %v650 = vadd.f32 0.0, %v649
        %v651 = vpop.f32.mrb[0].mxu0
        %v652 = vadd.f32 0.0, %v651
        %653 = vmatprep.mubr.bf16.mxu0 0
        %654 = vmatmul.mubr.bf16.gmra.mrb[0].mxu0 %v504
        %v655 = vpop.f32.mrb[0].mxu0
        %v656 = vadd.f32 0.0, %v655
        %v657 = vpop.f32.mrb[0].mxu0
        %v658 = vadd.f32 0.0, %v657
        %v659 = vpop.f32.mrb[0].mxu0
        %v660 = vadd.f32 0.0, %v659
        %v661 = vpop.f32.mrb[0].mxu0
        %v662 = vadd.f32 0.0, %v661
        %663 = vmatprep.mubr.bf16.mxu0 0
        %664 = vmatmul.mubr.bf16.gmra.mrb[0].mxu0 %v507
        %v665 = vpop.f32.mrb[0].mxu0
        %v666 = vadd.f32 0.0, %v665
        %v667 = vpop.f32.mrb[0].mxu0
        %v668 = vadd.f32 0.0, %v667
        %v669 = vpop.f32.mrb[0].mxu0
        %v670 = vadd.f32 0.0, %v669
        %v671 = vpop.f32.mrb[0].mxu0
        %v672 = vadd.f32 0.0, %v671
        %673 = vmatprep.mubr.bf16.mxu0 0
        %674 = vmatmul.mubr.bf16.gmra.mrb[0].mxu0 %v510
        %v675 = vpop.f32.mrb[0].mxu0
        %v676 = vadd.f32 0.0, %v675
        %v677 = vpop.f32.mrb[0].mxu0
        %v678 = vadd.f32 0.0, %v677
        %v679 = vpop.f32.mrb[0].mxu0
        %v680 = vadd.f32 0.0, %v679
        %v681 = vpop.f32.mrb[0].mxu0
        %v682 = vadd.f32 0.0, %v681
        %683 = vmatprep.mubr.bf16.mxu0 0
        %684 = vmatmul.mubr.bf16.gmra.mrb[0].mxu0 %v513
        %v685 = vpop.f32.mrb[0].mxu0
        %v686 = vadd.f32 0.0, %v685
        %v687 = vpop.f32.mrb[0].mxu0
        %v688 = vadd.f32 0.0, %v687
        %v689 = vpop.f32.mrb[0].mxu0
        %v690 = vadd.f32 0.0, %v689
        %v691 = vpop.f32.mrb[0].mxu0
        %v692 = vadd.f32 0.0, %v691
        %693 = vmatprep.mubr.bf16.mxu0 0
        %694 = vmatmul.mubr.bf16.gmra.mrb[0].mxu0 %v516
        %v695 = vpop.f32.mrb[0].mxu0
        %v696 = vadd.f32 0.0, %v695
        %v697 = vpop.f32.mrb[0].mxu0
        %v698 = vadd.f32 0.0, %v697
        %v699 = vpop.f32.mrb[0].mxu0
        %v700 = vadd.f32 0.0, %v699
        %v701 = vpop.f32.mrb[0].mxu0
        %v702 = vadd.f32 0.0, %v701
        %703 = vmatprep.mubr.bf16.mxu0 0
        %704 = vmatmul.mubr.bf16.gmra.mrb[0].mxu0 %v519
        %v705 = vpop.f32.mrb[0].mxu0
        %v706 = vadd.f32 0.0, %v705
        %v707 = vpop.f32.mrb[0].mxu0
        %v708 = vadd.f32 0.0, %v707
        %v709 = vpop.f32.mrb[0].mxu0
        %v710 = vadd.f32 0.0, %v709
        %v711 = vpop.f32.mrb[0].mxu0
        %v712 = vadd.f32 0.0, %v711
        %713 = vdwg.mxu0
        %v714 = vpack.c.bf16 %v560, %v556
        %v715 = vpack.c.bf16 %v562, %v558
        %v716 = vpack.c.bf16 %v570, %v566
        %v717 = vpack.c.bf16 %v572, %v568
        %v718 = vpack.c.bf16 %v580, %v576
        %v719 = vpack.c.bf16 %v582, %v578
        %v720 = vpack.c.bf16 %v590, %v586
        %v721 = vpack.c.bf16 %v592, %v588
        %v722 = vpack.c.bf16 %v600, %v596
        %v723 = vpack.c.bf16 %v602, %v598
        %v724 = vpack.c.bf16 %v610, %v606
        %v725 = vpack.c.bf16 %v612, %v608
        %v726 = vpack.c.bf16 %v620, %v616
        %v727 = vpack.c.bf16 %v622, %v618
        %v728 = vpack.c.bf16 %v630, %v626
        %v729 = vpack.c.bf16 %v632, %v628
        %v730 = vpack.c.bf16 %v640, %v636
        %v731 = vpack.c.bf16 %v642, %v638
        %v732 = vpack.c.bf16 %v650, %v646
        %v733 = vpack.c.bf16 %v652, %v648
        %v734 = vpack.c.bf16 %v660, %v656
        %v735 = vpack.c.bf16 %v662, %v658
        %v736 = vpack.c.bf16 %v670, %v666
        %v737 = vpack.c.bf16 %v672, %v668
        %v738 = vpack.c.bf16 %v680, %v676
        %v739 = vpack.c.bf16 %v682, %v678
        %v740 = vpack.c.bf16 %v690, %v686
        %v741 = vpack.c.bf16 %v692, %v688
        %v742 = vpack.c.bf16 %v700, %v696
        %v743 = vpack.c.bf16 %v702, %v698
        %v744 = vpack.c.bf16 %v710, %v706
        %v745 = vpack.c.bf16 %v712, %v708
        %v746 = vld [vmem:[%s361] sm:$0xff]
        %v747 = vld [vmem:[%s361 + $0x8] sm:$0xff]
        %v748 = vld [vmem:[%s361 + $0x10] sm:$0xff]
        %v749 = vld [vmem:[%s361 + $0x18] sm:$0xff]
        %v750 = vld [vmem:[%s361 + $0x20] sm:$0xff]
        %v751 = vld [vmem:[%s361 + $0x28] sm:$0xff]
        %v752 = vld [vmem:[%s361 + $0x30] sm:$0xff]
        %v753 = vld [vmem:[%s361 + $0x38] sm:$0xff]
        %v754 = vld [vmem:[%s361 + $0x40] sm:$0xff]
        %v755 = vld [vmem:[%s361 + $0x48] sm:$0xff]
        %v756 = vld [vmem:[%s361 + $0x50] sm:$0xff]
        %v757 = vld [vmem:[%s361 + $0x58] sm:$0xff]
        %v758 = vld [vmem:[%s361 + $0x60] sm:$0xff]
        %v759 = vld [vmem:[%s361 + $0x68] sm:$0xff]
        %v760 = vld [vmem:[%s361 + $0x70] sm:$0xff]
        %v761 = vld [vmem:[%s361 + $0x78] sm:$0xff]
        %v762 = vpack.c.bf16 %v747, %v746
        %v763 = vpack.c.bf16 %v749, %v748
        %v764 = vpack.c.bf16 %v751, %v750
        %v765 = vpack.c.bf16 %v753, %v752
        %v766 = vpack.c.bf16 %v755, %v754
        %v767 = vpack.c.bf16 %v757, %v756
        %v768 = vpack.c.bf16 %v759, %v758
        %v769 = vpack.c.bf16 %v761, %v760
        %v771 = vsel %vm472, %v762, 0
        %v774 = vsel %vm472, %v763, 0
        %v777 = vsel %vm472, %v764, 0
        %v780 = vsel %vm472, %v765, 0
        %v783 = vsel %vm472, %v766, 0
        %v786 = vsel %vm472, %v767, 0
        %v789 = vsel %vm472, %v768, 0
        %v792 = vsel %vm472, %v769, 0
        %794 = vmatprep.subr.bf16.mxu0 %v457
        %795 = vmatpush1.bf16.msra.mxu0 %v456
        %796 = vmatprep.subr.bf16.mxu0 %v459
        %797 = vmatpush1.bf16.msra.mxu0 %v458
        %798 = vmatprep.subr.bf16.mxu0 %v461
        %799 = vmatpush1.bf16.msra.mxu0 %v460
        %800 = vmatprep.subr.bf16.mxu0 %v463
        %801 = vmatpush1.bf16.msra.mxu0 %v462
        %802 = vmatprep.subr.bf16.mxu0 0
        %803 = vmatpush1.bf16.msra.mxu0 0
        %804 = vmatprep.subr.bf16.mxu0 0
        %805 = vmatpush1.bf16.msra.mxu0 0
        %806 = vmatprep.subr.bf16.mxu0 0
        %807 = vmatpush1.bf16.msra.mxu0 0
        %808 = vmatprep.subr.bf16.mxu0 0
        %809 = vmatpush1.bf16.msra.mxu0 0
        %810 = vmatprep.subr.bf16.mxu0 0
        %811 = vmatpush1.bf16.msra.mxu0 0
        %812 = vmatprep.subr.bf16.mxu0 0
        %813 = vmatpush1.bf16.msra.mxu0 0
        %814 = vmatprep.subr.bf16.mxu0 0
        %815 = vmatpush1.bf16.msra.mxu0 0
        %816 = vmatprep.subr.bf16.mxu0 0
        %817 = vmatpush1.bf16.msra.mxu0 0
        %818 = vmatprep.subr.bf16.mxu0 0
        %819 = vmatpush1.bf16.msra.mxu0 0
        %820 = vmatprep.subr.bf16.mxu0 0
        %821 = vmatpush1.bf16.msra.mxu0 0
        %822 = vmatprep.subr.bf16.mxu0 0
        %823 = vmatpush1.bf16.msra.mxu0 0
        %824 = vmatprep.subr.bf16.mxu0 0
        %825 = vmatpush1.bf16.msra.mxu0 0
        %826 = vmatprep.mubr.bf16.mxu0 0
        %827 = vmatmul.mubr.bf16.gmra.mrb[0].mxu0 %v771
        %v828 = vpop.f32.mrb[0].mxu0
        %v829 = vadd.f32 0.0, %v828
        %v830 = vpop.f32.mrb[0].mxu0
        %v831 = vadd.f32 0.0, %v830
        %v832 = vpop.f32.mrb[0].mxu0
        %v833 = vadd.f32 0.0, %v832
        %v834 = vpop.f32.mrb[0].mxu0
        %v835 = vadd.f32 0.0, %v834
        %836 = vmatprep.mubr.bf16.mxu0 0
        %837 = vmatmul.mubr.bf16.gmra.mrb[0].mxu0 %v774
        %v838 = vpop.f32.mrb[0].mxu0
        %v839 = vadd.f32 0.0, %v838
        %v840 = vpop.f32.mrb[0].mxu0
        %v841 = vadd.f32 0.0, %v840
        %v842 = vpop.f32.mrb[0].mxu0
        %v843 = vadd.f32 0.0, %v842
        %v844 = vpop.f32.mrb[0].mxu0
        %v845 = vadd.f32 0.0, %v844
        %846 = vmatprep.mubr.bf16.mxu0 0
        %847 = vmatmul.mubr.bf16.gmra.mrb[0].mxu0 %v777
        %v848 = vpop.f32.mrb[0].mxu0
        %v849 = vadd.f32 0.0, %v848
        %v850 = vpop.f32.mrb[0].mxu0
        %v851 = vadd.f32 0.0, %v850
        %v852 = vpop.f32.mrb[0].mxu0
        %v853 = vadd.f32 0.0, %v852
        %v854 = vpop.f32.mrb[0].mxu0
        %v855 = vadd.f32 0.0, %v854
        %856 = vmatprep.mubr.bf16.mxu0 0
        %857 = vmatmul.mubr.bf16.gmra.mrb[0].mxu0 %v780
        %v858 = vpop.f32.mrb[0].mxu0
        %v859 = vadd.f32 0.0, %v858
        %v860 = vpop.f32.mrb[0].mxu0
        %v861 = vadd.f32 0.0, %v860
        %v862 = vpop.f32.mrb[0].mxu0
        %v863 = vadd.f32 0.0, %v862
        %v864 = vpop.f32.mrb[0].mxu0
        %v865 = vadd.f32 0.0, %v864
        %866 = vmatprep.mubr.bf16.mxu0 0
        %867 = vmatmul.mubr.bf16.gmra.mrb[0].mxu0 %v783
        %v868 = vpop.f32.mrb[0].mxu0
        %v869 = vadd.f32 0.0, %v868
        %v870 = vpop.f32.mrb[0].mxu0
        %v871 = vadd.f32 0.0, %v870
        %v872 = vpop.f32.mrb[0].mxu0
        %v873 = vadd.f32 0.0, %v872
        %v874 = vpop.f32.mrb[0].mxu0
        %v875 = vadd.f32 0.0, %v874
        %876 = vmatprep.mubr.bf16.mxu0 0
        %877 = vmatmul.mubr.bf16.gmra.mrb[0].mxu0 %v786
        %v878 = vpop.f32.mrb[0].mxu0
        %v879 = vadd.f32 0.0, %v878
        %v880 = vpop.f32.mrb[0].mxu0
        %v881 = vadd.f32 0.0, %v880
        %v882 = vpop.f32.mrb[0].mxu0
        %v883 = vadd.f32 0.0, %v882
        %v884 = vpop.f32.mrb[0].mxu0
        %v885 = vadd.f32 0.0, %v884
        %886 = vmatprep.mubr.bf16.mxu0 0
        %887 = vmatmul.mubr.bf16.gmra.mrb[0].mxu0 %v789
        %v888 = vpop.f32.mrb[0].mxu0
        %v889 = vadd.f32 0.0, %v888
        %v890 = vpop.f32.mrb[0].mxu0
        %v891 = vadd.f32 0.0, %v890
        %v892 = vpop.f32.mrb[0].mxu0
        %v893 = vadd.f32 0.0, %v892
        %v894 = vpop.f32.mrb[0].mxu0
        %v895 = vadd.f32 0.0, %v894
        %896 = vmatprep.mubr.bf16.mxu0 0
        %897 = vmatmul.mubr.bf16.gmra.mrb[0].mxu0 %v792
        %v898 = vpop.f32.mrb[0].mxu0
        %v899 = vadd.f32 0.0, %v898
        %v900 = vpop.f32.mrb[0].mxu0
        %v901 = vadd.f32 0.0, %v900
        %v902 = vpop.f32.mrb[0].mxu0
        %v903 = vadd.f32 0.0, %v902
        %v904 = vpop.f32.mrb[0].mxu0
        %v905 = vadd.f32 0.0, %v904
        %906 = vdwg.mxu0
        %v907 = vpack.c.bf16 %v833, %v829
        %v908 = vpack.c.bf16 %v835, %v831
        %v909 = vpack.c.bf16 %v843, %v839
        %v910 = vpack.c.bf16 %v845, %v841
        %v911 = vpack.c.bf16 %v853, %v849
        %v912 = vpack.c.bf16 %v855, %v851
        %v913 = vpack.c.bf16 %v863, %v859
        %v914 = vpack.c.bf16 %v865, %v861
        %v915 = vpack.c.bf16 %v873, %v869
        %v916 = vpack.c.bf16 %v875, %v871
        %v917 = vpack.c.bf16 %v883, %v879
        %v918 = vpack.c.bf16 %v885, %v881
        %v919 = vpack.c.bf16 %v893, %v889
        %v920 = vpack.c.bf16 %v895, %v891
        %v921 = vpack.c.bf16 %v903, %v899
        %v922 = vpack.c.bf16 %v905, %v901
        %v923 = vld [vmem:[%s4] sm:$0x3]
        %v926 = vunpack.c.l.s4 1966171168
        %v927 = vunpack.c.0.s8 %v926
        %v928 = vlaneseq
        %v929 = vshrl.u32 %v928, 7
        %v930 = vsub.s32 %v927, %v929
        %v931 = vrot.slane %v923, %v930
        %v932 = vcombine.high %v931, %v931
        %v934 = vunpack.c.l.s4 1966171168
        %v935 = vunpack.c.0.s8 %v934
        %v936 = vlaneseq
        %v937 = vshrl.u32 %v936, 7
        %v938 = vsub.s32 %v935, %v937
        %v939 = vrot.slane %v931, %v938
        %v941 = vunpack.c.l.s4 1966171168
        %v942 = vunpack.c.0.s8 %v941
        %v943 = vlaneseq
        %v944 = vshrl.u32 %v943, 7
        %v945 = vsub.s32 %v942, %v944
        %v946 = vrot.slane %v932, %v945
        %949 = vmatprep.subr.bf16.mxu0 %v715
        %950 = vmatpush1.bf16.xpose.msra.mxu0 %v714
        %951 = vmatprep.subr.bf16.mxu0 %v717
        %952 = vmatpush1.bf16.xpose.msra.mxu0 %v716
        %953 = vmatprep.subr.bf16.mxu0 %v719
        %954 = vmatpush1.bf16.xpose.msra.mxu0 %v718
        %955 = vmatprep.subr.bf16.mxu0 %v721
        %956 = vmatpush1.bf16.xpose.msra.mxu0 %v720
        %957 = vmatprep.subr.bf16.mxu0 %v723
        %958 = vmatpush1.bf16.xpose.msra.mxu0 %v722
        %959 = vmatprep.subr.bf16.mxu0 %v725
        %960 = vmatpush1.bf16.xpose.msra.mxu0 %v724
        %961 = vmatprep.subr.bf16.mxu0 %v727
        %962 = vmatpush1.bf16.xpose.msra.mxu0 %v726
        %963 = vmatprep.subr.bf16.mxu0 %v729
        %964 = vmatpush1.bf16.xpose.msra.mxu0 %v728
        %965 = vmatprep.subr.bf16.mxu0 %v731
        %966 = vmatpush1.bf16.xpose.msra.mxu0 %v730
        %967 = vmatprep.subr.bf16.mxu0 %v733
        %968 = vmatpush1.bf16.xpose.msra.mxu0 %v732
        %969 = vmatprep.subr.bf16.mxu0 %v735
        %970 = vmatpush1.bf16.xpose.msra.mxu0 %v734
        %971 = vmatprep.subr.bf16.mxu0 %v737
        %972 = vmatpush1.bf16.xpose.msra.mxu0 %v736
        %973 = vmatprep.subr.bf16.mxu0 %v739
        %974 = vmatpush1.bf16.xpose.msra.mxu0 %v738
        %975 = vmatprep.subr.bf16.mxu0 %v741
        %976 = vmatpush1.bf16.xpose.msra.mxu0 %v740
        %977 = vmatprep.subr.bf16.mxu0 %v743
        %978 = vmatpush1.bf16.xpose.msra.mxu0 %v742
        %979 = vmatprep.subr.bf16.mxu0 %v745
        %980 = vmatpush1.bf16.xpose.msra.mxu0 %v744
        %981 = vmatprep.mubr.bf16.mxu0 %v946
        %982 = vmatmul.mubr.bf16.gmra.mrb[0].mxu0 %v939
        %v983 = vpop.f32.mrb[0].mxu0
        %v984 = vadd.f32 0.0, %v983
        %v985 = vpop.f32.mrb[0].mxu0
        %v986 = vadd.f32 0.0, %v985
        %v987 = vpop.f32.mrb[0].mxu0
        %v988 = vpop.f32.mrb[0].mxu0
        %989 = vdwg.mxu0
        %v990 = vld [vmem:[%s5] sm:$0x3]
        %v993 = vunpack.c.l.s4 1966171168
        %v994 = vunpack.c.0.s8 %v993
        %v995 = vlaneseq
        %v996 = vshrl.u32 %v995, 7
        %v997 = vsub.s32 %v994, %v996
        %v998 = vrot.slane %v990, %v997
        %v999 = vcombine.high %v998, %v998
        %v1001 = vunpack.c.l.s4 1966171168
        %v1002 = vunpack.c.0.s8 %v1001
        %v1003 = vlaneseq
        %v1004 = vshrl.u32 %v1003, 7
        %v1005 = vsub.s32 %v1002, %v1004
        %v1006 = vrot.slane %v998, %v1005
        %v1008 = vunpack.c.l.s4 1966171168
        %v1009 = vunpack.c.0.s8 %v1008
        %v1010 = vlaneseq
        %v1011 = vshrl.u32 %v1010, 7
        %v1012 = vsub.s32 %v1009, %v1011
        %v1013 = vrot.slane %v999, %v1012
        %1016 = vmatprep.subr.bf16.mxu0 %v1013
        %1017 = vmatpush1.bf16.xpose.msra.mxu0 %v1006
        %1018 = vmatprep.subr.bf16.mxu0 0
        %1019 = vmatpush1.bf16.xpose.msra.mxu0 0
        %1020 = vmatprep.subr.bf16.mxu0 0
        %1021 = vmatpush1.bf16.xpose.msra.mxu0 0
        %1022 = vmatprep.subr.bf16.mxu0 0
        %1023 = vmatpush1.bf16.xpose.msra.mxu0 0
        %1024 = vmatprep.subr.bf16.mxu0 0
        %1025 = vmatpush1.bf16.xpose.msra.mxu0 0
        %1026 = vmatprep.subr.bf16.mxu0 0
        %1027 = vmatpush1.bf16.xpose.msra.mxu0 0
        %1028 = vmatprep.subr.bf16.mxu0 0
        %1029 = vmatpush1.bf16.xpose.msra.mxu0 0
        %1030 = vmatprep.subr.bf16.mxu0 0
        %1031 = vmatpush1.bf16.xpose.msra.mxu0 0
        %1032 = vmatprep.subr.bf16.mxu0 0
        %1033 = vmatpush1.bf16.xpose.msra.mxu0 0
        %1034 = vmatprep.subr.bf16.mxu0 0
        %1035 = vmatpush1.bf16.xpose.msra.mxu0 0
        %1036 = vmatprep.subr.bf16.mxu0 0
        %1037 = vmatpush1.bf16.xpose.msra.mxu0 0
        %1038 = vmatprep.subr.bf16.mxu0 0
        %1039 = vmatpush1.bf16.xpose.msra.mxu0 0
        %1040 = vmatprep.subr.bf16.mxu0 0
        %1041 = vmatpush1.bf16.xpose.msra.mxu0 0
        %1042 = vmatprep.subr.bf16.mxu0 0
        %1043 = vmatpush1.bf16.xpose.msra.mxu0 0
        %1044 = vmatprep.subr.bf16.mxu0 0
        %1045 = vmatpush1.bf16.xpose.msra.mxu0 0
        %1046 = vmatprep.subr.bf16.mxu0 0
        %1047 = vmatpush1.bf16.xpose.msra.mxu0 0
        %1048 = vmatprep.mubr.bf16.mxu0 %v908
        %1049 = vmatmul.mubr.bf16.gmra.mrb[0].mxu0 %v907
        %v1050 = vpop.f32.mrb[0].mxu0
        %v1051 = vadd.f32 0.0, %v1050
        %v1052 = vpop.f32.mrb[0].mxu0
        %v1053 = vpop.f32.mrb[0].mxu0
        %v1054 = vadd.f32 0.0, %v1053
        %v1055 = vpop.f32.mrb[0].mxu0
        %1056 = vmatprep.mubr.bf16.mxu0 %v910
        %1057 = vmatmul.mubr.bf16.gmra.mrb[0].mxu0 %v909
        %v1058 = vpop.f32.mrb[0].mxu0
        %v1059 = vadd.f32 0.0, %v1058
        %v1060 = vpop.f32.mrb[0].mxu0
        %v1061 = vpop.f32.mrb[0].mxu0
        %v1062 = vadd.f32 0.0, %v1061
        %v1063 = vpop.f32.mrb[0].mxu0
        %1064 = vmatprep.mubr.bf16.mxu0 %v912
        %1065 = vmatmul.mubr.bf16.gmra.mrb[0].mxu0 %v911
        %v1066 = vpop.f32.mrb[0].mxu0
        %v1067 = vadd.f32 0.0, %v1066
        %v1068 = vpop.f32.mrb[0].mxu0
        %v1069 = vpop.f32.mrb[0].mxu0
        %v1070 = vadd.f32 0.0, %v1069
        %v1071 = vpop.f32.mrb[0].mxu0
        %1072 = vmatprep.mubr.bf16.mxu0 %v914
        %1073 = vmatmul.mubr.bf16.gmra.mrb[0].mxu0 %v913
        %v1074 = vpop.f32.mrb[0].mxu0
        %v1075 = vadd.f32 0.0, %v1074
        %v1076 = vpop.f32.mrb[0].mxu0
        %v1077 = vpop.f32.mrb[0].mxu0
        %v1078 = vadd.f32 0.0, %v1077
        %v1079 = vpop.f32.mrb[0].mxu0
        %1080 = vmatprep.mubr.bf16.mxu0 %v916
        %1081 = vmatmul.mubr.bf16.gmra.mrb[0].mxu0 %v915
        %v1082 = vpop.f32.mrb[0].mxu0
        %v1083 = vadd.f32 0.0, %v1082
        %v1084 = vpop.f32.mrb[0].mxu0
        %v1085 = vpop.f32.mrb[0].mxu0
        %v1086 = vadd.f32 0.0, %v1085
        %v1087 = vpop.f32.mrb[0].mxu0
        %1088 = vmatprep.mubr.bf16.mxu0 %v918
        %1089 = vmatmul.mubr.bf16.gmra.mrb[0].mxu0 %v917
        %v1090 = vpop.f32.mrb[0].mxu0
        %v1091 = vadd.f32 0.0, %v1090
        %v1092 = vpop.f32.mrb[0].mxu0
        %v1093 = vpop.f32.mrb[0].mxu0
        %v1094 = vadd.f32 0.0, %v1093
        %v1095 = vpop.f32.mrb[0].mxu0
        %1096 = vmatprep.mubr.bf16.mxu0 %v920
        %1097 = vmatmul.mubr.bf16.gmra.mrb[0].mxu0 %v919
        %v1098 = vpop.f32.mrb[0].mxu0
        %v1099 = vadd.f32 0.0, %v1098
        %v1100 = vpop.f32.mrb[0].mxu0
        %v1101 = vpop.f32.mrb[0].mxu0
        %v1102 = vadd.f32 0.0, %v1101
        %v1103 = vpop.f32.mrb[0].mxu0
        %1104 = vmatprep.mubr.bf16.mxu0 %v922
        %1105 = vmatmul.mubr.bf16.gmra.mrb[0].mxu0 %v921
        %v1106 = vpop.f32.mrb[0].mxu0
        %v1107 = vadd.f32 0.0, %v1106
        %v1108 = vpop.f32.mrb[0].mxu0
        %v1109 = vpop.f32.mrb[0].mxu0
        %v1110 = vadd.f32 0.0, %v1109
        %v1111 = vpop.f32.mrb[0].mxu0
        %1112 = vdwg.mxu0
        %v1113 = vld [vmem:[%s368] sm:$0xff]
        %v1114 = vld [vmem:[%s368 + $0x8] sm:$0xff]
        %v1115 = vld [vmem:[%s368 + $0x10] sm:$0xff]
        %v1116 = vld [vmem:[%s368 + $0x18] sm:$0xff]
        %v1117 = vld [vmem:[%s368 + $0x20] sm:$0xff]
        %v1118 = vld [vmem:[%s368 + $0x28] sm:$0xff]
        %v1119 = vld [vmem:[%s368 + $0x30] sm:$0xff]
        %v1120 = vld [vmem:[%s368 + $0x38] sm:$0xff]
        %vm1121 = vnez %v1113
        %vm1122 = vnez %v1114
        %vm1123 = vnez %v1115
        %vm1124 = vnez %v1116
        %vm1125 = vnez %v1117
        %vm1126 = vnez %v1118
        %vm1127 = vnez %v1119
        %vm1128 = vnez %v1120
        %1130 = vset.pattern.permute.xlu0 0
        %1131 = vperm.xlu0 %1130, %v1051
        %v1132 = vpop.permute.xlu0 %1131
        %1135 = vset.pattern.permute.xlu0 0
        %1136 = vperm.xlu0 %1135, %v1054
        %v1137 = vpop.permute.xlu0 %1136
        %1140 = vset.pattern.permute.xlu0 0
        %1141 = vperm.xlu0 %1140, %v1059
        %v1142 = vpop.permute.xlu0 %1141
        %1145 = vset.pattern.permute.xlu0 0
        %1146 = vperm.xlu0 %1145, %v1062
        %v1147 = vpop.permute.xlu0 %1146
        %1150 = vset.pattern.permute.xlu0 0
        %1151 = vperm.xlu0 %1150, %v1067
        %v1152 = vpop.permute.xlu0 %1151
        %1155 = vset.pattern.permute.xlu0 0
        %1156 = vperm.xlu0 %1155, %v1070
        %v1157 = vpop.permute.xlu0 %1156
        %1160 = vset.pattern.permute.xlu0 0
        %1161 = vperm.xlu0 %1160, %v1075
        %v1162 = vpop.permute.xlu0 %1161
        %1165 = vset.pattern.permute.xlu0 0
        %1166 = vperm.xlu0 %1165, %v1078
        %v1167 = vpop.permute.xlu0 %1166
        %1170 = vset.pattern.permute.xlu0 0
        %1171 = vperm.xlu0 %1170, %v1083
        %v1172 = vpop.permute.xlu0 %1171
        %1175 = vset.pattern.permute.xlu0 0
        %1176 = vperm.xlu0 %1175, %v1086
        %v1177 = vpop.permute.xlu0 %1176
        %1180 = vset.pattern.permute.xlu0 0
        %1181 = vperm.xlu0 %1180, %v1091
        %v1182 = vpop.permute.xlu0 %1181
        %1185 = vset.pattern.permute.xlu0 0
        %1186 = vperm.xlu0 %1185, %v1094
        %v1187 = vpop.permute.xlu0 %1186
        %1190 = vset.pattern.permute.xlu0 0
        %1191 = vperm.xlu0 %1190, %v1099
        %v1192 = vpop.permute.xlu0 %1191
        %1195 = vset.pattern.permute.xlu0 0
        %1196 = vperm.xlu0 %1195, %v1102
        %v1197 = vpop.permute.xlu0 %1196
        %1200 = vset.pattern.permute.xlu0 0
        %1201 = vperm.xlu0 %1200, %v1107
        %v1202 = vpop.permute.xlu0 %1201
        %1205 = vset.pattern.permute.xlu0 0
        %1206 = vperm.xlu0 %1205, %v1110
        %v1207 = vpop.permute.xlu0 %1206
        %v1209 = vlaneseq
        %v1210 = vshrl.u32 %v1209, 7
        %v1211 = vsub.s32 0, %v1210
        %v1212 = vrot.slane %v984, %v1211
        %v1213 = vlaneseq
        %v1214 = vshrl.u32 %v1213, 7
        %v1215 = vsub.s32 0, %v1214
        %v1216 = vrot.slane %v986, %v1215
        %v1217 = vadd.f32 %v1132, %v1212
        %v1218 = vadd.f32 %v1132, %v1216
        %v1219 = vadd.f32 %v1137, %v1212
        %v1220 = vadd.f32 %v1137, %v1216
        %v1221 = vadd.f32 %v1142, %v1212
        %v1222 = vadd.f32 %v1142, %v1216
        %v1223 = vadd.f32 %v1147, %v1212
        %v1224 = vadd.f32 %v1147, %v1216
        %v1225 = vadd.f32 %v1152, %v1212
        %v1226 = vadd.f32 %v1152, %v1216
        %v1227 = vadd.f32 %v1157, %v1212
        %v1228 = vadd.f32 %v1157, %v1216
        %v1229 = vadd.f32 %v1162, %v1212
        %v1230 = vadd.f32 %v1162, %v1216
        %v1231 = vadd.f32 %v1167, %v1212
        %v1232 = vadd.f32 %v1167, %v1216
        %v1233 = vadd.f32 %v1172, %v1212
        %v1234 = vadd.f32 %v1172, %v1216
        %v1235 = vadd.f32 %v1177, %v1212
        %v1236 = vadd.f32 %v1177, %v1216
        %v1237 = vadd.f32 %v1182, %v1212
        %v1238 = vadd.f32 %v1182, %v1216
        %v1239 = vadd.f32 %v1187, %v1212
        %v1240 = vadd.f32 %v1187, %v1216
        %v1241 = vadd.f32 %v1192, %v1212
        %v1242 = vadd.f32 %v1192, %v1216
        %v1243 = vadd.f32 %v1197, %v1212
        %v1244 = vadd.f32 %v1197, %v1216
        %v1245 = vadd.f32 %v1202, %v1212
        %v1246 = vadd.f32 %v1202, %v1216
        %v1247 = vadd.f32 %v1207, %v1212
        %v1248 = vadd.f32 %v1207, %v1216
        %vm1249 = vcmp.gt.f32.partialorder %v1217, 0.0
        %vm1250 = vcmp.gt.f32.partialorder %v1218, 0.0
        %vm1251 = vcmp.gt.f32.partialorder %v1219, 0.0
        %vm1252 = vcmp.gt.f32.partialorder %v1220, 0.0
        %vm1253 = vcmp.gt.f32.partialorder %v1221, 0.0
        %vm1254 = vcmp.gt.f32.partialorder %v1222, 0.0
        %vm1255 = vcmp.gt.f32.partialorder %v1223, 0.0
        %vm1256 = vcmp.gt.f32.partialorder %v1224, 0.0
        %vm1257 = vcmp.gt.f32.partialorder %v1225, 0.0
        %vm1258 = vcmp.gt.f32.partialorder %v1226, 0.0
        %vm1259 = vcmp.gt.f32.partialorder %v1227, 0.0
        %vm1260 = vcmp.gt.f32.partialorder %v1228, 0.0
        %vm1261 = vcmp.gt.f32.partialorder %v1229, 0.0
        %vm1262 = vcmp.gt.f32.partialorder %v1230, 0.0
        %vm1263 = vcmp.gt.f32.partialorder %v1231, 0.0
        %vm1264 = vcmp.gt.f32.partialorder %v1232, 0.0
        %vm1265 = vcmp.gt.f32.partialorder %v1233, 0.0
        %vm1266 = vcmp.gt.f32.partialorder %v1234, 0.0
        %vm1267 = vcmp.gt.f32.partialorder %v1235, 0.0
        %vm1268 = vcmp.gt.f32.partialorder %v1236, 0.0
        %vm1269 = vcmp.gt.f32.partialorder %v1237, 0.0
        %vm1270 = vcmp.gt.f32.partialorder %v1238, 0.0
        %vm1271 = vcmp.gt.f32.partialorder %v1239, 0.0
        %vm1272 = vcmp.gt.f32.partialorder %v1240, 0.0
        %vm1273 = vcmp.gt.f32.partialorder %v1241, 0.0
        %vm1274 = vcmp.gt.f32.partialorder %v1242, 0.0
        %vm1275 = vcmp.gt.f32.partialorder %v1243, 0.0
        %vm1276 = vcmp.gt.f32.partialorder %v1244, 0.0
        %vm1277 = vcmp.gt.f32.partialorder %v1245, 0.0
        %vm1278 = vcmp.gt.f32.partialorder %v1246, 0.0
        %vm1279 = vcmp.gt.f32.partialorder %v1247, 0.0
        %vm1280 = vcmp.gt.f32.partialorder %v1248, 0.0
        %v1281 = vmul.f32 %v1217, 0.2
        %v1282 = vmul.f32 %v1218, 0.2
        %v1283 = vmul.f32 %v1219, 0.2
        %v1284 = vmul.f32 %v1220, 0.2
        %v1285 = vmul.f32 %v1221, 0.2
        %v1286 = vmul.f32 %v1222, 0.2
        %v1287 = vmul.f32 %v1223, 0.2
        %v1288 = vmul.f32 %v1224, 0.2
        %v1289 = vmul.f32 %v1225, 0.2
        %v1290 = vmul.f32 %v1226, 0.2
        %v1291 = vmul.f32 %v1227, 0.2
        %v1292 = vmul.f32 %v1228, 0.2
        %v1293 = vmul.f32 %v1229, 0.2
        %v1294 = vmul.f32 %v1230, 0.2
        %v1295 = vmul.f32 %v1231, 0.2
        %v1296 = vmul.f32 %v1232, 0.2
        %v1297 = vmul.f32 %v1233, 0.2
        %v1298 = vmul.f32 %v1234, 0.2
        %v1299 = vmul.f32 %v1235, 0.2
        %v1300 = vmul.f32 %v1236, 0.2
        %v1301 = vmul.f32 %v1237, 0.2
        %v1302 = vmul.f32 %v1238, 0.2
        %v1303 = vmul.f32 %v1239, 0.2
        %v1304 = vmul.f32 %v1240, 0.2
        %v1305 = vmul.f32 %v1241, 0.2
        %v1306 = vmul.f32 %v1242, 0.2
        %v1307 = vmul.f32 %v1243, 0.2
        %v1308 = vmul.f32 %v1244, 0.2
        %v1309 = vmul.f32 %v1245, 0.2
        %v1310 = vmul.f32 %v1246, 0.2
        %v1311 = vmul.f32 %v1247, 0.2
        %v1312 = vmul.f32 %v1248, 0.2
        %v1313 = vsel %vm1249, %v1217, %v1281
        %v1314 = vsel %vm1250, %v1218, %v1282
        %v1315 = vsel %vm1251, %v1219, %v1283
        %v1316 = vsel %vm1252, %v1220, %v1284
        %v1317 = vsel %vm1253, %v1221, %v1285
        %v1318 = vsel %vm1254, %v1222, %v1286
        %v1319 = vsel %vm1255, %v1223, %v1287
        %v1320 = vsel %vm1256, %v1224, %v1288
        %v1321 = vsel %vm1257, %v1225, %v1289
        %v1322 = vsel %vm1258, %v1226, %v1290
        %v1323 = vsel %vm1259, %v1227, %v1291
        %v1324 = vsel %vm1260, %v1228, %v1292
        %v1325 = vsel %vm1261, %v1229, %v1293
        %v1326 = vsel %vm1262, %v1230, %v1294
        %v1327 = vsel %vm1263, %v1231, %v1295
        %v1328 = vsel %vm1264, %v1232, %v1296
        %v1329 = vsel %vm1265, %v1233, %v1297
        %v1330 = vsel %vm1266, %v1234, %v1298
        %v1331 = vsel %vm1267, %v1235, %v1299
        %v1332 = vsel %vm1268, %v1236, %v1300
        %v1333 = vsel %vm1269, %v1237, %v1301
        %v1334 = vsel %vm1270, %v1238, %v1302
        %v1335 = vsel %vm1271, %v1239, %v1303
        %v1336 = vsel %vm1272, %v1240, %v1304
        %v1337 = vsel %vm1273, %v1241, %v1305
        %v1338 = vsel %vm1274, %v1242, %v1306
        %v1339 = vsel %vm1275, %v1243, %v1307
        %v1340 = vsel %vm1276, %v1244, %v1308
        %v1341 = vsel %vm1277, %v1245, %v1309
        %v1342 = vsel %vm1278, %v1246, %v1310
        %v1343 = vsel %vm1279, %v1247, %v1311
        %v1344 = vsel %vm1280, %v1248, %v1312
        %v1345 = vsel %vm1121, 16843009, 0
        %v1346 = vsel %vm1122, 16843009, 0
        %v1347 = vsel %vm1123, 16843009, 0
        %v1348 = vsel %vm1124, 16843009, 0
        %v1349 = vsel %vm1125, 16843009, 0
        %v1350 = vsel %vm1126, 16843009, 0
        %v1351 = vsel %vm1127, 16843009, 0
        %v1352 = vsel %vm1128, 16843009, 0
        %v1353 = vunpack.c.0.s8 %v1345
        %v1354 = vunpack.c.0.s8 %v1346
        %v1355 = vunpack.c.1.s8 %v1345
        %v1356 = vunpack.c.1.s8 %v1346
        %v1357 = vunpack.c.2.s8 %v1345
        %v1358 = vunpack.c.2.s8 %v1346
        %v1359 = vunpack.c.3.s8 %v1345
        %v1360 = vunpack.c.3.s8 %v1346
        %v1361 = vunpack.c.0.s8 %v1347
        %v1362 = vunpack.c.0.s8 %v1348
        %v1363 = vunpack.c.1.s8 %v1347
        %v1364 = vunpack.c.1.s8 %v1348
        %v1365 = vunpack.c.2.s8 %v1347
        %v1366 = vunpack.c.2.s8 %v1348
        %v1367 = vunpack.c.3.s8 %v1347
        %v1368 = vunpack.c.3.s8 %v1348
        %v1369 = vunpack.c.0.s8 %v1349
        %v1370 = vunpack.c.0.s8 %v1350
        %v1371 = vunpack.c.1.s8 %v1349
        %v1372 = vunpack.c.1.s8 %v1350
        %v1373 = vunpack.c.2.s8 %v1349
        %v1374 = vunpack.c.2.s8 %v1350
        %v1375 = vunpack.c.3.s8 %v1349
        %v1376 = vunpack.c.3.s8 %v1350
        %v1377 = vunpack.c.0.s8 %v1351
        %v1378 = vunpack.c.0.s8 %v1352
        %v1379 = vunpack.c.1.s8 %v1351
        %v1380 = vunpack.c.1.s8 %v1352
        %v1381 = vunpack.c.2.s8 %v1351
        %v1382 = vunpack.c.2.s8 %v1352
        %v1383 = vunpack.c.3.s8 %v1351
        %v1384 = vunpack.c.3.s8 %v1352
        %v1385 = vpack.c.b16 %v1354, %v1353
        %v1386 = vpack.c.b8 %v1385, %v1385
        %v1387 = vpack.c.b16 %v1356, %v1355
        %v1388 = vpack.c.b8 %v1387, %v1387
        %v1389 = vpack.c.b16 %v1358, %v1357
        %v1390 = vpack.c.b8 %v1389, %v1389
        %v1391 = vpack.c.b16 %v1360, %v1359
        %v1392 = vpack.c.b8 %v1391, %v1391
        %v1393 = vpack.c.b16 %v1362, %v1361
        %v1394 = vpack.c.b8 %v1393, %v1393
        %v1395 = vpack.c.b16 %v1364, %v1363
        %v1396 = vpack.c.b8 %v1395, %v1395
        %v1397 = vpack.c.b16 %v1366, %v1365
        %v1398 = vpack.c.b8 %v1397, %v1397
        %v1399 = vpack.c.b16 %v1368, %v1367
        %v1400 = vpack.c.b8 %v1399, %v1399
        %v1401 = vpack.c.b16 %v1370, %v1369
        %v1402 = vpack.c.b8 %v1401, %v1401
        %v1403 = vpack.c.b16 %v1372, %v1371
        %v1404 = vpack.c.b8 %v1403, %v1403
        %v1405 = vpack.c.b16 %v1374, %v1373
        %v1406 = vpack.c.b8 %v1405, %v1405
        %v1407 = vpack.c.b16 %v1376, %v1375
        %v1408 = vpack.c.b8 %v1407, %v1407
        %v1409 = vpack.c.b16 %v1378, %v1377
        %v1410 = vpack.c.b8 %v1409, %v1409
        %v1411 = vpack.c.b16 %v1380, %v1379
        %v1412 = vpack.c.b8 %v1411, %v1411
        %v1413 = vpack.c.b16 %v1382, %v1381
        %v1414 = vpack.c.b8 %v1413, %v1413
        %v1415 = vpack.c.b16 %v1384, %v1383
        %v1416 = vpack.c.b8 %v1415, %v1415
        %vm1417 = vnez %v1386
        %vm1418 = vnez %v1388
        %vm1419 = vnez %v1390
        %vm1420 = vnez %v1392
        %vm1421 = vnez %v1394
        %vm1422 = vnez %v1396
        %vm1423 = vnez %v1398
        %vm1424 = vnez %v1400
        %vm1425 = vnez %v1402
        %vm1426 = vnez %v1404
        %vm1427 = vnez %v1406
        %vm1428 = vnez %v1408
        %vm1429 = vnez %v1410
        %vm1430 = vnez %v1412
        %vm1431 = vnez %v1414
        %vm1432 = vnez %v1416
        %v1433 = vsel %vm1417, 16843009, 0
        %v1434 = vsel %vm1418, 16843009, 0
        %v1435 = vsel %vm1419, 16843009, 0
        %v1436 = vsel %vm1420, 16843009, 0
        %v1437 = vsel %vm1421, 16843009, 0
        %v1438 = vsel %vm1422, 16843009, 0
        %v1439 = vsel %vm1423, 16843009, 0
        %v1440 = vsel %vm1424, 16843009, 0
        %v1441 = vsel %vm1425, 16843009, 0
        %v1442 = vsel %vm1426, 16843009, 0
        %v1443 = vsel %vm1427, 16843009, 0
        %v1444 = vsel %vm1428, 16843009, 0
        %v1445 = vsel %vm1429, 16843009, 0
        %v1446 = vsel %vm1430, 16843009, 0
        %v1447 = vsel %vm1431, 16843009, 0
        %v1448 = vsel %vm1432, 16843009, 0
        %v1449 = vunpack.c.0.s8 %v1433
        %v1450 = vunpack.c.1.s8 %v1433
        %v1451 = vunpack.c.0.s8 %v1434
        %v1452 = vunpack.c.1.s8 %v1434
        %v1453 = vunpack.c.0.s8 %v1435
        %v1454 = vunpack.c.1.s8 %v1435
        %v1455 = vunpack.c.0.s8 %v1436
        %v1456 = vunpack.c.1.s8 %v1436
        %v1457 = vunpack.c.0.s8 %v1437
        %v1458 = vunpack.c.1.s8 %v1437
        %v1459 = vunpack.c.0.s8 %v1438
        %v1460 = vunpack.c.1.s8 %v1438
        %v1461 = vunpack.c.0.s8 %v1439
        %v1462 = vunpack.c.1.s8 %v1439
        %v1463 = vunpack.c.0.s8 %v1440
        %v1464 = vunpack.c.1.s8 %v1440
        %v1465 = vunpack.c.0.s8 %v1441
        %v1466 = vunpack.c.1.s8 %v1441
        %v1467 = vunpack.c.0.s8 %v1442
        %v1468 = vunpack.c.1.s8 %v1442
        %v1469 = vunpack.c.0.s8 %v1443
        %v1470 = vunpack.c.1.s8 %v1443
        %v1471 = vunpack.c.0.s8 %v1444
        %v1472 = vunpack.c.1.s8 %v1444
        %v1473 = vunpack.c.0.s8 %v1445
        %v1474 = vunpack.c.1.s8 %v1445
        %v1475 = vunpack.c.0.s8 %v1446
        %v1476 = vunpack.c.1.s8 %v1446
        %v1477 = vunpack.c.0.s8 %v1447
        %v1478 = vunpack.c.1.s8 %v1447
        %v1479 = vunpack.c.0.s8 %v1448
        %v1480 = vunpack.c.1.s8 %v1448
        %vm1481 = vcmp.ne.s32.totalorder %v1449, 0
        %vm1482 = vcmp.ne.s32.totalorder %v1450, 0
        %vm1483 = vcmp.ne.s32.totalorder %v1451, 0
        %vm1484 = vcmp.ne.s32.totalorder %v1452, 0
        %vm1485 = vcmp.ne.s32.totalorder %v1453, 0
        %vm1486 = vcmp.ne.s32.totalorder %v1454, 0
        %vm1487 = vcmp.ne.s32.totalorder %v1455, 0
        %vm1488 = vcmp.ne.s32.totalorder %v1456, 0
        %vm1489 = vcmp.ne.s32.totalorder %v1457, 0
        %vm1490 = vcmp.ne.s32.totalorder %v1458, 0
        %vm1491 = vcmp.ne.s32.totalorder %v1459, 0
        %vm1492 = vcmp.ne.s32.totalorder %v1460, 0
        %vm1493 = vcmp.ne.s32.totalorder %v1461, 0
        %vm1494 = vcmp.ne.s32.totalorder %v1462, 0
        %vm1495 = vcmp.ne.s32.totalorder %v1463, 0
        %vm1496 = vcmp.ne.s32.totalorder %v1464, 0
        %vm1497 = vcmp.ne.s32.totalorder %v1465, 0
        %vm1498 = vcmp.ne.s32.totalorder %v1466, 0
        %vm1499 = vcmp.ne.s32.totalorder %v1467, 0
        %vm1500 = vcmp.ne.s32.totalorder %v1468, 0
        %vm1501 = vcmp.ne.s32.totalorder %v1469, 0
        %vm1502 = vcmp.ne.s32.totalorder %v1470, 0
        %vm1503 = vcmp.ne.s32.totalorder %v1471, 0
        %vm1504 = vcmp.ne.s32.totalorder %v1472, 0
        %vm1505 = vcmp.ne.s32.totalorder %v1473, 0
        %vm1506 = vcmp.ne.s32.totalorder %v1474, 0
        %vm1507 = vcmp.ne.s32.totalorder %v1475, 0
        %vm1508 = vcmp.ne.s32.totalorder %v1476, 0
        %vm1509 = vcmp.ne.s32.totalorder %v1477, 0
        %vm1510 = vcmp.ne.s32.totalorder %v1478, 0
        %vm1511 = vcmp.ne.s32.totalorder %v1479, 0
        %vm1512 = vcmp.ne.s32.totalorder %v1480, 0
        %v1513 = vsel %vm1481, %v1313, -inf
        %v1514 = vsel %vm1482, %v1314, -inf
        %v1515 = vsel %vm1483, %v1315, -inf
        %v1516 = vsel %vm1484, %v1316, -inf
        %v1517 = vsel %vm1485, %v1317, -inf
        %v1518 = vsel %vm1486, %v1318, -inf
        %v1519 = vsel %vm1487, %v1319, -inf
        %v1520 = vsel %vm1488, %v1320, -inf
        %v1521 = vsel %vm1489, %v1321, -inf
        %v1522 = vsel %vm1490, %v1322, -inf
        %v1523 = vsel %vm1491, %v1323, -inf
        %v1524 = vsel %vm1492, %v1324, -inf
        %v1525 = vsel %vm1493, %v1325, -inf
        %v1526 = vsel %vm1494, %v1326, -inf
        %v1527 = vsel %vm1495, %v1327, -inf
        %v1528 = vsel %vm1496, %v1328, -inf
        %v1529 = vsel %vm1497, %v1329, -inf
        %v1530 = vsel %vm1498, %v1330, -inf
        %v1531 = vsel %vm1499, %v1331, -inf
        %v1532 = vsel %vm1500, %v1332, -inf
        %v1533 = vsel %vm1501, %v1333, -inf
        %v1534 = vsel %vm1502, %v1334, -inf
        %v1535 = vsel %vm1503, %v1335, -inf
        %v1536 = vsel %vm1504, %v1336, -inf
        %v1537 = vsel %vm1505, %v1337, -inf
        %v1538 = vsel %vm1506, %v1338, -inf
        %v1539 = vsel %vm1507, %v1339, -inf
        %v1540 = vsel %vm1508, %v1340, -inf
        %v1541 = vsel %vm1509, %v1341, -inf
        %v1542 = vsel %vm1510, %v1342, -inf
        %v1543 = vsel %vm1511, %v1343, -inf
        %v1544 = vsel %vm1512, %v1344, -inf
        %v1545 = vmax.f32 %v1513, %v1514
        %1546 = vmax.xlane.f32.xlu0 %v1545
        %v1547 = vpop.xlane.xlu0 %1546
        %v1548 = vmax.f32 %v1515, %v1516
        %1549 = vmax.xlane.f32.xlu0 %v1548
        %v1550 = vpop.xlane.xlu0 %1549
        %v1551 = vmax.f32 %v1517, %v1518
        %1552 = vmax.xlane.f32.xlu0 %v1551
        %v1553 = vpop.xlane.xlu0 %1552
        %v1554 = vmax.f32 %v1519, %v1520
        %1555 = vmax.xlane.f32.xlu0 %v1554
        %v1556 = vpop.xlane.xlu0 %1555
        %v1557 = vmax.f32 %v1521, %v1522
        %1558 = vmax.xlane.f32.xlu0 %v1557
        %v1559 = vpop.xlane.xlu0 %1558
        %v1560 = vmax.f32 %v1523, %v1524
        %1561 = vmax.xlane.f32.xlu0 %v1560
        %v1562 = vpop.xlane.xlu0 %1561
        %v1563 = vmax.f32 %v1525, %v1526
        %1564 = vmax.xlane.f32.xlu0 %v1563
        %v1565 = vpop.xlane.xlu0 %1564
        %v1566 = vmax.f32 %v1527, %v1528
        %1567 = vmax.xlane.f32.xlu0 %v1566
        %v1568 = vpop.xlane.xlu0 %1567
        %v1569 = vmax.f32 %v1529, %v1530
        %1570 = vmax.xlane.f32.xlu0 %v1569
        %v1571 = vpop.xlane.xlu0 %1570
        %v1572 = vmax.f32 %v1531, %v1532
        %1573 = vmax.xlane.f32.xlu0 %v1572
        %v1574 = vpop.xlane.xlu0 %1573
        %v1575 = vmax.f32 %v1533, %v1534
        %1576 = vmax.xlane.f32.xlu0 %v1575
        %v1577 = vpop.xlane.xlu0 %1576
        %v1578 = vmax.f32 %v1535, %v1536
        %1579 = vmax.xlane.f32.xlu0 %v1578
        %v1580 = vpop.xlane.xlu0 %1579
        %v1581 = vmax.f32 %v1537, %v1538
        %1582 = vmax.xlane.f32.xlu0 %v1581
        %v1583 = vpop.xlane.xlu0 %1582
        %v1584 = vmax.f32 %v1539, %v1540
        %1585 = vmax.xlane.f32.xlu0 %v1584
        %v1586 = vpop.xlane.xlu0 %1585
        %v1587 = vmax.f32 %v1541, %v1542
        %1588 = vmax.xlane.f32.xlu0 %v1587
        %v1589 = vpop.xlane.xlu0 %1588
        %v1590 = vmax.f32 %v1543, %v1544
        %1591 = vmax.xlane.f32.xlu0 %v1590
        %v1592 = vpop.xlane.xlu0 %1591
        %v1593 = vsub.f32 %v1313, %v1547
        %v1594 = vsub.f32 %v1314, %v1547
        %v1595 = vsub.f32 %v1315, %v1550
        %v1596 = vsub.f32 %v1316, %v1550
        %v1597 = vsub.f32 %v1317, %v1553
        %v1598 = vsub.f32 %v1318, %v1553
        %v1599 = vsub.f32 %v1319, %v1556
        %v1600 = vsub.f32 %v1320, %v1556
        %v1601 = vsub.f32 %v1321, %v1559
        %v1602 = vsub.f32 %v1322, %v1559
        %v1603 = vsub.f32 %v1323, %v1562
        %v1604 = vsub.f32 %v1324, %v1562
        %v1605 = vsub.f32 %v1325, %v1565
        %v1606 = vsub.f32 %v1326, %v1565
        %v1607 = vsub.f32 %v1327, %v1568
        %v1608 = vsub.f32 %v1328, %v1568
        %v1609 = vsub.f32 %v1329, %v1571
        %v1610 = vsub.f32 %v1330, %v1571
        %v1611 = vsub.f32 %v1331, %v1574
        %v1612 = vsub.f32 %v1332, %v1574
        %v1613 = vsub.f32 %v1333, %v1577
        %v1614 = vsub.f32 %v1334, %v1577
        %v1615 = vsub.f32 %v1335, %v1580
        %v1616 = vsub.f32 %v1336, %v1580
        %v1617 = vsub.f32 %v1337, %v1583
        %v1618 = vsub.f32 %v1338, %v1583
        %v1619 = vsub.f32 %v1339, %v1586
        %v1620 = vsub.f32 %v1340, %v1586
        %v1621 = vsub.f32 %v1341, %v1589
        %v1622 = vsub.f32 %v1342, %v1589
        %v1623 = vsub.f32 %v1343, %v1592
        %v1624 = vsub.f32 %v1344, %v1592
        %v1625 = vmul.f32 %v1593, 1.442695
        %v1626 = vpow.pop %v1625
        %v1627 = vmul.f32 %v1594, 1.442695
        %v1628 = vpow.pop %v1627
        %v1629 = vmul.f32 %v1595, 1.442695
        %v1630 = vpow.pop %v1629
        %v1631 = vmul.f32 %v1596, 1.442695
        %v1632 = vpow.pop %v1631
        %v1633 = vmul.f32 %v1597, 1.442695
        %v1634 = vpow.pop %v1633
        %v1635 = vmul.f32 %v1598, 1.442695
        %v1636 = vpow.pop %v1635
        %v1637 = vmul.f32 %v1599, 1.442695
        %v1638 = vpow.pop %v1637
        %v1639 = vmul.f32 %v1600, 1.442695
        %v1640 = vpow.pop %v1639
        %v1641 = vmul.f32 %v1601, 1.442695
        %v1642 = vpow.pop %v1641
        %v1643 = vmul.f32 %v1602, 1.442695
        %v1644 = vpow.pop %v1643
        %v1645 = vmul.f32 %v1603, 1.442695
        %v1646 = vpow.pop %v1645
        %v1647 = vmul.f32 %v1604, 1.442695
        %v1648 = vpow.pop %v1647
        %v1649 = vmul.f32 %v1605, 1.442695
        %v1650 = vpow.pop %v1649
        %v1651 = vmul.f32 %v1606, 1.442695
        %v1652 = vpow.pop %v1651
        %v1653 = vmul.f32 %v1607, 1.442695
        %v1654 = vpow.pop %v1653
        %v1655 = vmul.f32 %v1608, 1.442695
        %v1656 = vpow.pop %v1655
        %v1657 = vmul.f32 %v1609, 1.442695
        %v1658 = vpow.pop %v1657
        %v1659 = vmul.f32 %v1610, 1.442695
        %v1660 = vpow.pop %v1659
        %v1661 = vmul.f32 %v1611, 1.442695
        %v1662 = vpow.pop %v1661
        %v1663 = vmul.f32 %v1612, 1.442695
        %v1664 = vpow.pop %v1663
        %v1665 = vmul.f32 %v1613, 1.442695
        %v1666 = vpow.pop %v1665
        %v1667 = vmul.f32 %v1614, 1.442695
        %v1668 = vpow.pop %v1667
        %v1669 = vmul.f32 %v1615, 1.442695
        %v1670 = vpow.pop %v1669
        %v1671 = vmul.f32 %v1616, 1.442695
        %v1672 = vpow.pop %v1671
        %v1673 = vmul.f32 %v1617, 1.442695
        %v1674 = vpow.pop %v1673
        %v1675 = vmul.f32 %v1618, 1.442695
        %v1676 = vpow.pop %v1675
        %v1677 = vmul.f32 %v1619, 1.442695
        %v1678 = vpow.pop %v1677
        %v1679 = vmul.f32 %v1620, 1.442695
        %v1680 = vpow.pop %v1679
        %v1681 = vmul.f32 %v1621, 1.442695
        %v1682 = vpow.pop %v1681
        %v1683 = vmul.f32 %v1622, 1.442695
        %v1684 = vpow.pop %v1683
        %v1685 = vmul.f32 %v1623, 1.442695
        %v1686 = vpow.pop %v1685
        %v1687 = vmul.f32 %v1624, 1.442695
        %v1688 = vpow.pop %v1687
        %v1689 = vsel %vm1481, %v1626, 0.0
        %v1690 = vsel %vm1482, %v1628, 0.0
        %v1691 = vsel %vm1483, %v1630, 0.0
        %v1692 = vsel %vm1484, %v1632, 0.0
        %v1693 = vsel %vm1485, %v1634, 0.0
        %v1694 = vsel %vm1486, %v1636, 0.0
        %v1695 = vsel %vm1487, %v1638, 0.0
        %v1696 = vsel %vm1488, %v1640, 0.0
        %v1697 = vsel %vm1489, %v1642, 0.0
        %v1698 = vsel %vm1490, %v1644, 0.0
        %v1699 = vsel %vm1491, %v1646, 0.0
        %v1700 = vsel %vm1492, %v1648, 0.0
        %v1701 = vsel %vm1493, %v1650, 0.0
        %v1702 = vsel %vm1494, %v1652, 0.0
        %v1703 = vsel %vm1495, %v1654, 0.0
        %v1704 = vsel %vm1496, %v1656, 0.0
        %v1705 = vsel %vm1497, %v1658, 0.0
        %v1706 = vsel %vm1498, %v1660, 0.0
        %v1707 = vsel %vm1499, %v1662, 0.0
        %v1708 = vsel %vm1500, %v1664, 0.0
        %v1709 = vsel %vm1501, %v1666, 0.0
        %v1710 = vsel %vm1502, %v1668, 0.0
        %v1711 = vsel %vm1503, %v1670, 0.0
        %v1712 = vsel %vm1504, %v1672, 0.0
        %v1713 = vsel %vm1505, %v1674, 0.0
        %v1714 = vsel %vm1506, %v1676, 0.0
        %v1715 = vsel %vm1507, %v1678, 0.0
        %v1716 = vsel %vm1508, %v1680, 0.0
        %v1717 = vsel %vm1509, %v1682, 0.0
        %v1718 = vsel %vm1510, %v1684, 0.0
        %v1719 = vsel %vm1511, %v1686, 0.0
        %v1720 = vsel %vm1512, %v1688, 0.0
        %v1721 = vpack.c.bf16 %v1691, %v1689
        %v1722 = vpack.c.bf16 %v1692, %v1690
        %v1723 = vpack.c.bf16 %v1695, %v1693
        %v1724 = vpack.c.bf16 %v1696, %v1694
        %v1725 = vpack.c.bf16 %v1699, %v1697
        %v1726 = vpack.c.bf16 %v1700, %v1698
        %v1727 = vpack.c.bf16 %v1703, %v1701
        %v1728 = vpack.c.bf16 %v1704, %v1702
        %v1729 = vpack.c.bf16 %v1707, %v1705
        %v1730 = vpack.c.bf16 %v1708, %v1706
        %v1731 = vpack.c.bf16 %v1711, %v1709
        %v1732 = vpack.c.bf16 %v1712, %v1710
        %v1733 = vpack.c.bf16 %v1715, %v1713
        %v1734 = vpack.c.bf16 %v1716, %v1714
        %v1735 = vpack.c.bf16 %v1719, %v1717
        %v1736 = vpack.c.bf16 %v1720, %v1718
        %1737 = vmatprep.subr.bf16.mxu0 0
        %1738 = vmatpush1.bf16.msra.mxu0 %v714
        %1739 = vmatprep.subr.bf16.mxu0 0
        %1740 = vmatpush1.bf16.msra.mxu0 %v716
        %1741 = vmatprep.subr.bf16.mxu0 0
        %1742 = vmatpush1.bf16.msra.mxu0 %v718
        %1743 = vmatprep.subr.bf16.mxu0 0
        %1744 = vmatpush1.bf16.msra.mxu0 %v720
        %1745 = vmatprep.subr.bf16.mxu0 0
        %1746 = vmatpush1.bf16.msra.mxu0 %v722
        %1747 = vmatprep.subr.bf16.mxu0 0
        %1748 = vmatpush1.bf16.msra.mxu0 %v724
        %1749 = vmatprep.subr.bf16.mxu0 0
        %1750 = vmatpush1.bf16.msra.mxu0 %v726
        %1751 = vmatprep.subr.bf16.mxu0 0
        %1752 = vmatpush1.bf16.msra.mxu0 %v728
        %1753 = vmatprep.subr.bf16.mxu0 0
        %1754 = vmatpush1.bf16.msra.mxu0 %v730
        %1755 = vmatprep.subr.bf16.mxu0 0
        %1756 = vmatpush1.bf16.msra.mxu0 %v732
        %1757 = vmatprep.subr.bf16.mxu0 0
        %1758 = vmatpush1.bf16.msra.mxu0 %v734
        %1759 = vmatprep.subr.bf16.mxu0 0
        %1760 = vmatpush1.bf16.msra.mxu0 %v736
        %1761 = vmatprep.subr.bf16.mxu0 0
        %1762 = vmatpush1.bf16.msra.mxu0 %v738
        %1763 = vmatprep.subr.bf16.mxu0 0
        %1764 = vmatpush1.bf16.msra.mxu0 %v740
        %1765 = vmatprep.subr.bf16.mxu0 0
        %1766 = vmatpush1.bf16.msra.mxu0 %v742
        %1767 = vmatprep.subr.bf16.mxu0 0
        %1768 = vmatpush1.bf16.msra.mxu0 %v744
        %1769 = vmatprep.mubr.bf16.mxu0 %v1722
        %1770 = vmatmul.mubr.bf16.gmra.mrb[0].mxu0 %v1721
        %v1771 = vpop.f32.mrb[0].mxu0
        %v1772 = vadd.f32 0.0, %v1771
        %v1773 = vpop.f32.mrb[0].mxu0
        %v1774 = vpop.f32.mrb[0].mxu0
        %v1775 = vadd.f32 0.0, %v1774
        %v1776 = vpop.f32.mrb[0].mxu0
        %1777 = vmatprep.mubr.bf16.mxu0 %v1724
        %1778 = vmatmul.mubr.bf16.gmra.mrb[0].mxu0 %v1723
        %v1779 = vpop.f32.mrb[0].mxu0
        %v1780 = vadd.f32 0.0, %v1779
        %v1781 = vpop.f32.mrb[0].mxu0
        %v1782 = vpop.f32.mrb[0].mxu0
        %v1783 = vadd.f32 0.0, %v1782
        %v1784 = vpop.f32.mrb[0].mxu0
        %1785 = vmatprep.mubr.bf16.mxu0 %v1726
        %1786 = vmatmul.mubr.bf16.gmra.mrb[0].mxu0 %v1725
        %v1787 = vpop.f32.mrb[0].mxu0
        %v1788 = vadd.f32 0.0, %v1787
        %v1789 = vpop.f32.mrb[0].mxu0
        %v1790 = vpop.f32.mrb[0].mxu0
        %v1791 = vadd.f32 0.0, %v1790
        %v1792 = vpop.f32.mrb[0].mxu0
        %1793 = vmatprep.mubr.bf16.mxu0 %v1728
        %1794 = vmatmul.mubr.bf16.gmra.mrb[0].mxu0 %v1727
        %v1795 = vpop.f32.mrb[0].mxu0
        %v1796 = vadd.f32 0.0, %v1795
        %v1797 = vpop.f32.mrb[0].mxu0
        %v1798 = vpop.f32.mrb[0].mxu0
        %v1799 = vadd.f32 0.0, %v1798
        %v1800 = vpop.f32.mrb[0].mxu0
        %1801 = vmatprep.mubr.bf16.mxu0 %v1730
        %1802 = vmatmul.mubr.bf16.gmra.mrb[0].mxu0 %v1729
        %v1803 = vpop.f32.mrb[0].mxu0
        %v1804 = vadd.f32 0.0, %v1803
        %v1805 = vpop.f32.mrb[0].mxu0
        %v1806 = vpop.f32.mrb[0].mxu0
        %v1807 = vadd.f32 0.0, %v1806
        %v1808 = vpop.f32.mrb[0].mxu0
        %1809 = vmatprep.mubr.bf16.mxu0 %v1732
        %1810 = vmatmul.mubr.bf16.gmra.mrb[0].mxu0 %v1731
        %v1811 = vpop.f32.mrb[0].mxu0
        %v1812 = vadd.f32 0.0, %v1811
        %v1813 = vpop.f32.mrb[0].mxu0
        %v1814 = vpop.f32.mrb[0].mxu0
        %v1815 = vadd.f32 0.0, %v1814
        %v1816 = vpop.f32.mrb[0].mxu0
        %1817 = vmatprep.mubr.bf16.mxu0 %v1734
        %1818 = vmatmul.mubr.bf16.gmra.mrb[0].mxu0 %v1733
        %v1819 = vpop.f32.mrb[0].mxu0
        %v1820 = vadd.f32 0.0, %v1819
        %v1821 = vpop.f32.mrb[0].mxu0
        %v1822 = vpop.f32.mrb[0].mxu0
        %v1823 = vadd.f32 0.0, %v1822
        %v1824 = vpop.f32.mrb[0].mxu0
        %1825 = vmatprep.mubr.bf16.mxu0 %v1736
        %1826 = vmatmul.mubr.bf16.gmra.mrb[0].mxu0 %v1735
        %v1827 = vpop.f32.mrb[0].mxu0
        %v1828 = vadd.f32 0.0, %v1827
        %v1829 = vpop.f32.mrb[0].mxu0
        %v1830 = vpop.f32.mrb[0].mxu0
        %v1831 = vadd.f32 0.0, %v1830
        %v1832 = vpop.f32.mrb[0].mxu0
        %1833 = vdwg.mxu0
        %v1834 = vadd.f32 %v1689, %v1690
        %1835 = vadd.xlane.f32.xlu0 %v1834
        %v1836 = vpop.xlane.xlu0 %1835
        %v1837 = vadd.f32 %v1691, %v1692
        %1838 = vadd.xlane.f32.xlu0 %v1837
        %v1839 = vpop.xlane.xlu0 %1838
        %v1840 = vadd.f32 %v1693, %v1694
        %1841 = vadd.xlane.f32.xlu0 %v1840
        %v1842 = vpop.xlane.xlu0 %1841
        %v1843 = vadd.f32 %v1695, %v1696
        %1844 = vadd.xlane.f32.xlu0 %v1843
        %v1845 = vpop.xlane.xlu0 %1844
        %v1846 = vadd.f32 %v1697, %v1698
        %1847 = vadd.xlane.f32.xlu0 %v1846
        %v1848 = vpop.xlane.xlu0 %1847
        %v1849 = vadd.f32 %v1699, %v1700
        %1850 = vadd.xlane.f32.xlu0 %v1849
        %v1851 = vpop.xlane.xlu0 %1850
        %v1852 = vadd.f32 %v1701, %v1702
        %1853 = vadd.xlane.f32.xlu0 %v1852
        %v1854 = vpop.xlane.xlu0 %1853
        %v1855 = vadd.f32 %v1703, %v1704
        %1856 = vadd.xlane.f32.xlu0 %v1855
        %v1857 = vpop.xlane.xlu0 %1856
        %v1858 = vadd.f32 %v1705, %v1706
        %1859 = vadd.xlane.f32.xlu0 %v1858
        %v1860 = vpop.xlane.xlu0 %1859
        %v1861 = vadd.f32 %v1707, %v1708
        %1862 = vadd.xlane.f32.xlu0 %v1861
        %v1863 = vpop.xlane.xlu0 %1862
        %v1864 = vadd.f32 %v1709, %v1710
        %1865 = vadd.xlane.f32.xlu0 %v1864
        %v1866 = vpop.xlane.xlu0 %1865
        %v1867 = vadd.f32 %v1711, %v1712
        %1868 = vadd.xlane.f32.xlu0 %v1867
        %v1869 = vpop.xlane.xlu0 %1868
        %v1870 = vadd.f32 %v1713, %v1714
        %1871 = vadd.xlane.f32.xlu0 %v1870
        %v1872 = vpop.xlane.xlu0 %1871
        %v1873 = vadd.f32 %v1715, %v1716
        %1874 = vadd.xlane.f32.xlu0 %v1873
        %v1875 = vpop.xlane.xlu0 %1874
        %v1876 = vadd.f32 %v1717, %v1718
        %1877 = vadd.xlane.f32.xlu0 %v1876
        %v1878 = vpop.xlane.xlu0 %1877
        %v1879 = vadd.f32 %v1719, %v1720
        %1880 = vadd.xlane.f32.xlu0 %v1879
        %v1881 = vpop.xlane.xlu0 %1880
        %v1882 = vrcp.pop %v1836
        %v1883 = vrcp.pop %v1839
        %v1884 = vrcp.pop %v1842
        %v1885 = vrcp.pop %v1845
        %v1886 = vrcp.pop %v1848
        %v1887 = vrcp.pop %v1851
        %v1888 = vrcp.pop %v1854
        %v1889 = vrcp.pop %v1857
        %v1890 = vrcp.pop %v1860
        %v1891 = vrcp.pop %v1863
        %v1892 = vrcp.pop %v1866
        %v1893 = vrcp.pop %v1869
        %v1894 = vrcp.pop %v1872
        %v1895 = vrcp.pop %v1875
        %v1896 = vrcp.pop %v1878
        %v1897 = vrcp.pop %v1881
        %v1898 = vmul.f32 %v1772, %v1882
        %v1899 = vmul.f32 %v1775, %v1883
        %v1900 = vmul.f32 %v1780, %v1884
        %v1901 = vmul.f32 %v1783, %v1885
        %v1902 = vmul.f32 %v1788, %v1886
        %v1903 = vmul.f32 %v1791, %v1887
        %v1904 = vmul.f32 %v1796, %v1888
        %v1905 = vmul.f32 %v1799, %v1889
        %v1906 = vmul.f32 %v1804, %v1890
        %v1907 = vmul.f32 %v1807, %v1891
        %v1908 = vmul.f32 %v1812, %v1892
        %v1909 = vmul.f32 %v1815, %v1893
        %v1910 = vmul.f32 %v1820, %v1894
        %v1911 = vmul.f32 %v1823, %v1895
        %v1912 = vmul.f32 %v1828, %v1896
        %v1913 = vmul.f32 %v1831, %v1897
        %v1914 = vld [vmem:[%s6] sm:$0x1]
        %v1915 = vlaneseq
        %v1916 = vshrl.u32 %v1915, 7
        %v1917 = vsub.s32 0, %v1916
        %v1918 = vrot.slane %v1914, %v1917
        %v1919 = vadd.f32 %v1898, %v1918
        %v1920 = vadd.f32 %v1899, %v1918
        %v1921 = vadd.f32 %v1900, %v1918
        %v1922 = vadd.f32 %v1901, %v1918
        %v1923 = vadd.f32 %v1902, %v1918
        %v1924 = vadd.f32 %v1903, %v1918
        %v1925 = vadd.f32 %v1904, %v1918
        %v1926 = vadd.f32 %v1905, %v1918
        %v1927 = vadd.f32 %v1906, %v1918
        %v1928 = vadd.f32 %v1907, %v1918
        %v1929 = vadd.f32 %v1908, %v1918
        %v1930 = vadd.f32 %v1909, %v1918
        %v1931 = vadd.f32 %v1910, %v1918
        %v1932 = vadd.f32 %v1911, %v1918
        %v1933 = vadd.f32 %v1912, %v1918
        %v1934 = vadd.f32 %v1913, %v1918
        %vm1935 = vcmp.gt.f32.partialorder %v1919, 0.0
        %vm1936 = vcmp.gt.f32.partialorder %v1920, 0.0
        %vm1937 = vcmp.gt.f32.partialorder %v1921, 0.0
        %vm1938 = vcmp.gt.f32.partialorder %v1922, 0.0
        %vm1939 = vcmp.gt.f32.partialorder %v1923, 0.0
        %vm1940 = vcmp.gt.f32.partialorder %v1924, 0.0
        %vm1941 = vcmp.gt.f32.partialorder %v1925, 0.0
        %vm1942 = vcmp.gt.f32.partialorder %v1926, 0.0
        %vm1943 = vcmp.gt.f32.partialorder %v1927, 0.0
        %vm1944 = vcmp.gt.f32.partialorder %v1928, 0.0
        %vm1945 = vcmp.gt.f32.partialorder %v1929, 0.0
        %vm1946 = vcmp.gt.f32.partialorder %v1930, 0.0
        %vm1947 = vcmp.gt.f32.partialorder %v1931, 0.0
        %vm1948 = vcmp.gt.f32.partialorder %v1932, 0.0
        %vm1949 = vcmp.gt.f32.partialorder %v1933, 0.0
        %vm1950 = vcmp.gt.f32.partialorder %v1934, 0.0
        %v1951 = vstv %s375
        %v1952 = vmul.f32 %v1951, %v1919
        %v1953 = vmul.f32 %v1951, %v1920
        %v1954 = vmul.f32 %v1951, %v1921
        %v1955 = vmul.f32 %v1951, %v1922
        %v1956 = vmul.f32 %v1951, %v1923
        %v1957 = vmul.f32 %v1951, %v1924
        %v1958 = vmul.f32 %v1951, %v1925
        %v1959 = vmul.f32 %v1951, %v1926
        %v1960 = vmul.f32 %v1951, %v1927
        %v1961 = vmul.f32 %v1951, %v1928
        %v1962 = vmul.f32 %v1951, %v1929
        %v1963 = vmul.f32 %v1951, %v1930
        %v1964 = vmul.f32 %v1951, %v1931
        %v1965 = vmul.f32 %v1951, %v1932
        %v1966 = vmul.f32 %v1951, %v1933
        %v1967 = vmul.f32 %v1951, %v1934
        %v1968 = vsel %vm1935, %v1919, %v1952
        %v1969 = vsel %vm1936, %v1920, %v1953
        %v1970 = vsel %vm1937, %v1921, %v1954
        %v1971 = vsel %vm1938, %v1922, %v1955
        %v1972 = vsel %vm1939, %v1923, %v1956
        %v1973 = vsel %vm1940, %v1924, %v1957
        %v1974 = vsel %vm1941, %v1925, %v1958
        %v1975 = vsel %vm1942, %v1926, %v1959
        %v1976 = vsel %vm1943, %v1927, %v1960
        %v1977 = vsel %vm1944, %v1928, %v1961
        %v1978 = vsel %vm1945, %v1929, %v1962
        %v1979 = vsel %vm1946, %v1930, %v1963
        %v1980 = vsel %vm1947, %v1931, %v1964
        %v1981 = vsel %vm1948, %v1932, %v1965
        %v1982 = vsel %vm1949, %v1933, %v1966
        %v1983 = vsel %vm1950, %v1934, %v1967
        %1984 = vst [vmem:[%s349] sm:$0xff] %v1968
        %1985 = vst [vmem:[%s349 + $0x8] sm:$0xff] %v1969
        %1986 = vst [vmem:[%s349 + $0x10] sm:$0xff] %v1970
        %1987 = vst [vmem:[%s349 + $0x18] sm:$0xff] %v1971
        %1988 = vst [vmem:[%s349 + $0x20] sm:$0xff] %v1972
        %1989 = vst [vmem:[%s349 + $0x28] sm:$0xff] %v1973
        %1990 = vst [vmem:[%s349 + $0x30] sm:$0xff] %v1974
        %1991 = vst [vmem:[%s349 + $0x38] sm:$0xff] %v1975
        %1992 = vst [vmem:[%s349 + $0x40] sm:$0xff] %v1976
        %1993 = vst [vmem:[%s349 + $0x48] sm:$0xff] %v1977
        %1994 = vst [vmem:[%s349 + $0x50] sm:$0xff] %v1978
        %1995 = vst [vmem:[%s349 + $0x58] sm:$0xff] %v1979
        %1996 = vst [vmem:[%s349 + $0x60] sm:$0xff] %v1980
        %1997 = vst [vmem:[%s349 + $0x68] sm:$0xff] %v1981
        %1998 = vst [vmem:[%s349 + $0x70] sm:$0xff] %v1982
        %1999 = vst [vmem:[%s349 + $0x78] sm:$0xff] %v1983
        %2000 = vset.pattern.permute.xlu0 1
        %2001 = vperm.xlu0 %2000, %v1051
        %v2002 = vpop.permute.xlu0 %2001
        %2004 = vset.pattern.permute.xlu0 1
        %2005 = vperm.xlu0 %2004, %v1054
        %v2006 = vpop.permute.xlu0 %2005
        %2008 = vset.pattern.permute.xlu0 1
        %2009 = vperm.xlu0 %2008, %v1059
        %v2010 = vpop.permute.xlu0 %2009
        %2012 = vset.pattern.permute.xlu0 1
        %2013 = vperm.xlu0 %2012, %v1062
        %v2014 = vpop.permute.xlu0 %2013
        %2016 = vset.pattern.permute.xlu0 1
        %2017 = vperm.xlu0 %2016, %v1067
        %v2018 = vpop.permute.xlu0 %2017
        %2020 = vset.pattern.permute.xlu0 1
        %2021 = vperm.xlu0 %2020, %v1070
        %v2022 = vpop.permute.xlu0 %2021
        %2024 = vset.pattern.permute.xlu0 1
        %2025 = vperm.xlu0 %2024, %v1075
        %v2026 = vpop.permute.xlu0 %2025
        %2028 = vset.pattern.permute.xlu0 1
        %2029 = vperm.xlu0 %2028, %v1078
        %v2030 = vpop.permute.xlu0 %2029
        %2032 = vset.pattern.permute.xlu0 1
        %2033 = vperm.xlu0 %2032, %v1083
        %v2034 = vpop.permute.xlu0 %2033
        %2036 = vset.pattern.permute.xlu0 1
        %2037 = vperm.xlu0 %2036, %v1086
        %v2038 = vpop.permute.xlu0 %2037
        %2040 = vset.pattern.permute.xlu0 1
        %2041 = vperm.xlu0 %2040, %v1091
        %v2042 = vpop.permute.xlu0 %2041
        %2044 = vset.pattern.permute.xlu0 1
        %2045 = vperm.xlu0 %2044, %v1094
        %v2046 = vpop.permute.xlu0 %2045
        %2048 = vset.pattern.permute.xlu0 1
        %2049 = vperm.xlu0 %2048, %v1099
        %v2050 = vpop.permute.xlu0 %2049
        %2052 = vset.pattern.permute.xlu0 1
        %2053 = vperm.xlu0 %2052, %v1102
        %v2054 = vpop.permute.xlu0 %2053
        %2056 = vset.pattern.permute.xlu0 1
        %2057 = vperm.xlu0 %2056, %v1107
        %v2058 = vpop.permute.xlu0 %2057
        %2060 = vset.pattern.permute.xlu0 1
        %2061 = vperm.xlu0 %2060, %v1110
        %v2062 = vpop.permute.xlu0 %2061
        %v2064 = vlaneseq
        %v2065 = vshrl.u32 %v2064, 7
        %v2066 = vsub.s32 1, %v2065
        %v2067 = vrot.slane %v984, %v2066
        %v2068 = vlaneseq
        %v2069 = vshrl.u32 %v2068, 7
        %v2070 = vsub.s32 1, %v2069
        %v2071 = vrot.slane %v986, %v2070
        %v2072 = vadd.f32 %v2002, %v2067
        %v2073 = vadd.f32 %v2002, %v2071
        %v2074 = vadd.f32 %v2006, %v2067
        %v2075 = vadd.f32 %v2006, %v2071
        %v2076 = vadd.f32 %v2010, %v2067
        %v2077 = vadd.f32 %v2010, %v2071
        %v2078 = vadd.f32 %v2014, %v2067
        %v2079 = vadd.f32 %v2014, %v2071
        %v2080 = vadd.f32 %v2018, %v2067
        %v2081 = vadd.f32 %v2018, %v2071
        %v2082 = vadd.f32 %v2022, %v2067
        %v2083 = vadd.f32 %v2022, %v2071
        %v2084 = vadd.f32 %v2026, %v2067
        %v2085 = vadd.f32 %v2026, %v2071
        %v2086 = vadd.f32 %v2030, %v2067
        %v2087 = vadd.f32 %v2030, %v2071
        %v2088 = vadd.f32 %v2034, %v2067
        %v2089 = vadd.f32 %v2034, %v2071
        %v2090 = vadd.f32 %v2038, %v2067
        %v2091 = vadd.f32 %v2038, %v2071
        %v2092 = vadd.f32 %v2042, %v2067
        %v2093 = vadd.f32 %v2042, %v2071
        %v2094 = vadd.f32 %v2046, %v2067
        %v2095 = vadd.f32 %v2046, %v2071
        %v2096 = vadd.f32 %v2050, %v2067
        %v2097 = vadd.f32 %v2050, %v2071
        %v2098 = vadd.f32 %v2054, %v2067
        %v2099 = vadd.f32 %v2054, %v2071
        %v2100 = vadd.f32 %v2058, %v2067
        %v2101 = vadd.f32 %v2058, %v2071
        %v2102 = vadd.f32 %v2062, %v2067
        %v2103 = vadd.f32 %v2062, %v2071
        %vm2104 = vcmp.gt.f32.partialorder %v2072, 0.0
        %vm2105 = vcmp.gt.f32.partialorder %v2073, 0.0
        %vm2106 = vcmp.gt.f32.partialorder %v2074, 0.0
        %vm2107 = vcmp.gt.f32.partialorder %v2075, 0.0
        %vm2108 = vcmp.gt.f32.partialorder %v2076, 0.0
        %vm2109 = vcmp.gt.f32.partialorder %v2077, 0.0
        %vm2110 = vcmp.gt.f32.partialorder %v2078, 0.0
        %vm2111 = vcmp.gt.f32.partialorder %v2079, 0.0
        %vm2112 = vcmp.gt.f32.partialorder %v2080, 0.0
        %vm2113 = vcmp.gt.f32.partialorder %v2081, 0.0
        %vm2114 = vcmp.gt.f32.partialorder %v2082, 0.0
        %vm2115 = vcmp.gt.f32.partialorder %v2083, 0.0
        %vm2116 = vcmp.gt.f32.partialorder %v2084, 0.0
        %vm2117 = vcmp.gt.f32.partialorder %v2085, 0.0
        %vm2118 = vcmp.gt.f32.partialorder %v2086, 0.0
        %vm2119 = vcmp.gt.f32.partialorder %v2087, 0.0
        %vm2120 = vcmp.gt.f32.partialorder %v2088, 0.0
        %vm2121 = vcmp.gt.f32.partialorder %v2089, 0.0
        %vm2122 = vcmp.gt.f32.partialorder %v2090, 0.0
        %vm2123 = vcmp.gt.f32.partialorder %v2091, 0.0
        %vm2124 = vcmp.gt.f32.partialorder %v2092, 0.0
        %vm2125 = vcmp.gt.f32.partialorder %v2093, 0.0
        %vm2126 = vcmp.gt.f32.partialorder %v2094, 0.0
        %vm2127 = vcmp.gt.f32.partialorder %v2095, 0.0
        %vm2128 = vcmp.gt.f32.partialorder %v2096, 0.0
        %vm2129 = vcmp.gt.f32.partialorder %v2097, 0.0
        %vm2130 = vcmp.gt.f32.partialorder %v2098, 0.0
        %vm2131 = vcmp.gt.f32.partialorder %v2099, 0.0
        %vm2132 = vcmp.gt.f32.partialorder %v2100, 0.0
        %vm2133 = vcmp.gt.f32.partialorder %v2101, 0.0
        %vm2134 = vcmp.gt.f32.partialorder %v2102, 0.0
        %vm2135 = vcmp.gt.f32.partialorder %v2103, 0.0
        %v2136 = vmul.f32 %v2072, 0.2
        %v2137 = vmul.f32 %v2073, 0.2
        %v2138 = vmul.f32 %v2074, 0.2
        %v2139 = vmul.f32 %v2075, 0.2
        %v2140 = vmul.f32 %v2076, 0.2
        %v2141 = vmul.f32 %v2077, 0.2
        %v2142 = vmul.f32 %v2078, 0.2
        %v2143 = vmul.f32 %v2079, 0.2
        %v2144 = vmul.f32 %v2080, 0.2
        %v2145 = vmul.f32 %v2081, 0.2
        %v2146 = vmul.f32 %v2082, 0.2
        %v2147 = vmul.f32 %v2083, 0.2
        %v2148 = vmul.f32 %v2084, 0.2
        %v2149 = vmul.f32 %v2085, 0.2
        %v2150 = vmul.f32 %v2086, 0.2
        %v2151 = vmul.f32 %v2087, 0.2
        %v2152 = vmul.f32 %v2088, 0.2
        %v2153 = vmul.f32 %v2089, 0.2
        %v2154 = vmul.f32 %v2090, 0.2
        %v2155 = vmul.f32 %v2091, 0.2
        %v2156 = vmul.f32 %v2092, 0.2
        %v2157 = vmul.f32 %v2093, 0.2
        %v2158 = vmul.f32 %v2094, 0.2
        %v2159 = vmul.f32 %v2095, 0.2
        %v2160 = vmul.f32 %v2096, 0.2
        %v2161 = vmul.f32 %v2097, 0.2
        %v2162 = vmul.f32 %v2098, 0.2
        %v2163 = vmul.f32 %v2099, 0.2
        %v2164 = vmul.f32 %v2100, 0.2
        %v2165 = vmul.f32 %v2101, 0.2
        %v2166 = vmul.f32 %v2102, 0.2
        %v2167 = vmul.f32 %v2103, 0.2
        %v2168 = vsel %vm2104, %v2072, %v2136
        %v2169 = vsel %vm2105, %v2073, %v2137
        %v2170 = vsel %vm2106, %v2074, %v2138
        %v2171 = vsel %vm2107, %v2075, %v2139
        %v2172 = vsel %vm2108, %v2076, %v2140
        %v2173 = vsel %vm2109, %v2077, %v2141
        %v2174 = vsel %vm2110, %v2078, %v2142
        %v2175 = vsel %vm2111, %v2079, %v2143
        %v2176 = vsel %vm2112, %v2080, %v2144
        %v2177 = vsel %vm2113, %v2081, %v2145
        %v2178 = vsel %vm2114, %v2082, %v2146
        %v2179 = vsel %vm2115, %v2083, %v2147
        %v2180 = vsel %vm2116, %v2084, %v2148
        %v2181 = vsel %vm2117, %v2085, %v2149
        %v2182 = vsel %vm2118, %v2086, %v2150
        %v2183 = vsel %vm2119, %v2087, %v2151
        %v2184 = vsel %vm2120, %v2088, %v2152
        %v2185 = vsel %vm2121, %v2089, %v2153
        %v2186 = vsel %vm2122, %v2090, %v2154
        %v2187 = vsel %vm2123, %v2091, %v2155
        %v2188 = vsel %vm2124, %v2092, %v2156
        %v2189 = vsel %vm2125, %v2093, %v2157
        %v2190 = vsel %vm2126, %v2094, %v2158
        %v2191 = vsel %vm2127, %v2095, %v2159
        %v2192 = vsel %vm2128, %v2096, %v2160
        %v2193 = vsel %vm2129, %v2097, %v2161
        %v2194 = vsel %vm2130, %v2098, %v2162
        %v2195 = vsel %vm2131, %v2099, %v2163
        %v2196 = vsel %vm2132, %v2100, %v2164
        %v2197 = vsel %vm2133, %v2101, %v2165
        %v2198 = vsel %vm2134, %v2102, %v2166
        %v2199 = vsel %vm2135, %v2103, %v2167
        %v2200 = vsel %vm1481, %v2168, -inf
        %v2201 = vsel %vm1482, %v2169, -inf
        %v2202 = vsel %vm1483, %v2170, -inf
        %v2203 = vsel %vm1484, %v2171, -inf
        %v2204 = vsel %vm1485, %v2172, -inf
        %v2205 = vsel %vm1486, %v2173, -inf
        %v2206 = vsel %vm1487, %v2174, -inf
        %v2207 = vsel %vm1488, %v2175, -inf
        %v2208 = vsel %vm1489, %v2176, -inf
        %v2209 = vsel %vm1490, %v2177, -inf
        %v2210 = vsel %vm1491, %v2178, -inf
        %v2211 = vsel %vm1492, %v2179, -inf
        %v2212 = vsel %vm1493, %v2180, -inf
        %v2213 = vsel %vm1494, %v2181, -inf
        %v2214 = vsel %vm1495, %v2182, -inf
        %v2215 = vsel %vm1496, %v2183, -inf
        %v2216 = vsel %vm1497, %v2184, -inf
        %v2217 = vsel %vm1498, %v2185, -inf
        %v2218 = vsel %vm1499, %v2186, -inf
        %v2219 = vsel %vm1500, %v2187, -inf
        %v2220 = vsel %vm1501, %v2188, -inf
        %v2221 = vsel %vm1502, %v2189, -inf
        %v2222 = vsel %vm1503, %v2190, -inf
        %v2223 = vsel %vm1504, %v2191, -inf
        %v2224 = vsel %vm1505, %v2192, -inf
        %v2225 = vsel %vm1506, %v2193, -inf
        %v2226 = vsel %vm1507, %v2194, -inf
        %v2227 = vsel %vm1508, %v2195, -inf
        %v2228 = vsel %vm1509, %v2196, -inf
        %v2229 = vsel %vm1510, %v2197, -inf
        %v2230 = vsel %vm1511, %v2198, -inf
        %v2231 = vsel %vm1512, %v2199, -inf
        %v2232 = vmax.f32 %v2200, %v2201
        %2233 = vmax.xlane.f32.xlu0 %v2232
        %v2234 = vpop.xlane.xlu0 %2233
        %v2235 = vmax.f32 %v2202, %v2203
        %2236 = vmax.xlane.f32.xlu0 %v2235
        %v2237 = vpop.xlane.xlu0 %2236
        %v2238 = vmax.f32 %v2204, %v2205
        %2239 = vmax.xlane.f32.xlu0 %v2238
        %v2240 = vpop.xlane.xlu0 %2239
        %v2241 = vmax.f32 %v2206, %v2207
        %2242 = vmax.xlane.f32.xlu0 %v2241
        %v2243 = vpop.xlane.xlu0 %2242
        %v2244 = vmax.f32 %v2208, %v2209
        %2245 = vmax.xlane.f32.xlu0 %v2244
        %v2246 = vpop.xlane.xlu0 %2245
        %v2247 = vmax.f32 %v2210, %v2211
        %2248 = vmax.xlane.f32.xlu0 %v2247
        %v2249 = vpop.xlane.xlu0 %2248
        %v2250 = vmax.f32 %v2212, %v2213
        %2251 = vmax.xlane.f32.xlu0 %v2250
        %v2252 = vpop.xlane.xlu0 %2251
        %v2253 = vmax.f32 %v2214, %v2215
        %2254 = vmax.xlane.f32.xlu0 %v2253
        %v2255 = vpop.xlane.xlu0 %2254
        %v2256 = vmax.f32 %v2216, %v2217
        %2257 = vmax.xlane.f32.xlu0 %v2256
        %v2258 = vpop.xlane.xlu0 %2257
        %v2259 = vmax.f32 %v2218, %v2219
        %2260 = vmax.xlane.f32.xlu0 %v2259
        %v2261 = vpop.xlane.xlu0 %2260
        %v2262 = vmax.f32 %v2220, %v2221
        %2263 = vmax.xlane.f32.xlu0 %v2262
        %v2264 = vpop.xlane.xlu0 %2263
        %v2265 = vmax.f32 %v2222, %v2223
        %2266 = vmax.xlane.f32.xlu0 %v2265
        %v2267 = vpop.xlane.xlu0 %2266
        %v2268 = vmax.f32 %v2224, %v2225
        %2269 = vmax.xlane.f32.xlu0 %v2268
        %v2270 = vpop.xlane.xlu0 %2269
        %v2271 = vmax.f32 %v2226, %v2227
        %2272 = vmax.xlane.f32.xlu0 %v2271
        %v2273 = vpop.xlane.xlu0 %2272
        %v2274 = vmax.f32 %v2228, %v2229
        %2275 = vmax.xlane.f32.xlu0 %v2274
        %v2276 = vpop.xlane.xlu0 %2275
        %v2277 = vmax.f32 %v2230, %v2231
        %2278 = vmax.xlane.f32.xlu0 %v2277
        %v2279 = vpop.xlane.xlu0 %2278
        %v2280 = vsub.f32 %v2168, %v2234
        %v2281 = vsub.f32 %v2169, %v2234
        %v2282 = vsub.f32 %v2170, %v2237
        %v2283 = vsub.f32 %v2171, %v2237
        %v2284 = vsub.f32 %v2172, %v2240
        %v2285 = vsub.f32 %v2173, %v2240
        %v2286 = vsub.f32 %v2174, %v2243
        %v2287 = vsub.f32 %v2175, %v2243
        %v2288 = vsub.f32 %v2176, %v2246
        %v2289 = vsub.f32 %v2177, %v2246
        %v2290 = vsub.f32 %v2178, %v2249
        %v2291 = vsub.f32 %v2179, %v2249
        %v2292 = vsub.f32 %v2180, %v2252
        %v2293 = vsub.f32 %v2181, %v2252
        %v2294 = vsub.f32 %v2182, %v2255
        %v2295 = vsub.f32 %v2183, %v2255
        %v2296 = vsub.f32 %v2184, %v2258
        %v2297 = vsub.f32 %v2185, %v2258
        %v2298 = vsub.f32 %v2186, %v2261
        %v2299 = vsub.f32 %v2187, %v2261
        %v2300 = vsub.f32 %v2188, %v2264
        %v2301 = vsub.f32 %v2189, %v2264
        %v2302 = vsub.f32 %v2190, %v2267
        %v2303 = vsub.f32 %v2191, %v2267
        %v2304 = vsub.f32 %v2192, %v2270
        %v2305 = vsub.f32 %v2193, %v2270
        %v2306 = vsub.f32 %v2194, %v2273
        %v2307 = vsub.f32 %v2195, %v2273
        %v2308 = vsub.f32 %v2196, %v2276
        %v2309 = vsub.f32 %v2197, %v2276
        %v2310 = vsub.f32 %v2198, %v2279
        %v2311 = vsub.f32 %v2199, %v2279
        %v2312 = vmul.f32 %v2280, 1.442695
        %v2313 = vpow.pop %v2312
        %v2314 = vmul.f32 %v2281, 1.442695
        %v2315 = vpow.pop %v2314
        %v2316 = vmul.f32 %v2282, 1.442695
        %v2317 = vpow.pop %v2316
        %v2318 = vmul.f32 %v2283, 1.442695
        %v2319 = vpow.pop %v2318
        %v2320 = vmul.f32 %v2284, 1.442695
        %v2321 = vpow.pop %v2320
        %v2322 = vmul.f32 %v2285, 1.442695
        %v2323 = vpow.pop %v2322
        %v2324 = vmul.f32 %v2286, 1.442695
        %v2325 = vpow.pop %v2324
        %v2326 = vmul.f32 %v2287, 1.442695
        %v2327 = vpow.pop %v2326
        %v2328 = vmul.f32 %v2288, 1.442695
        %v2329 = vpow.pop %v2328
        %v2330 = vmul.f32 %v2289, 1.442695
        %v2331 = vpow.pop %v2330
        %v2332 = vmul.f32 %v2290, 1.442695
        %v2333 = vpow.pop %v2332
        %v2334 = vmul.f32 %v2291, 1.442695
        %v2335 = vpow.pop %v2334
        %v2336 = vmul.f32 %v2292, 1.442695
        %v2337 = vpow.pop %v2336
        %v2338 = vmul.f32 %v2293, 1.442695
        %v2339 = vpow.pop %v2338
        %v2340 = vmul.f32 %v2294, 1.442695
        %v2341 = vpow.pop %v2340
        %v2342 = vmul.f32 %v2295, 1.442695
        %v2343 = vpow.pop %v2342
        %v2344 = vmul.f32 %v2296, 1.442695
        %v2345 = vpow.pop %v2344
        %v2346 = vmul.f32 %v2297, 1.442695
        %v2347 = vpow.pop %v2346
        %v2348 = vmul.f32 %v2298, 1.442695
        %v2349 = vpow.pop %v2348
        %v2350 = vmul.f32 %v2299, 1.442695
        %v2351 = vpow.pop %v2350
        %v2352 = vmul.f32 %v2300, 1.442695
        %v2353 = vpow.pop %v2352
        %v2354 = vmul.f32 %v2301, 1.442695
        %v2355 = vpow.pop %v2354
        %v2356 = vmul.f32 %v2302, 1.442695
        %v2357 = vpow.pop %v2356
        %v2358 = vmul.f32 %v2303, 1.442695
        %v2359 = vpow.pop %v2358
        %v2360 = vmul.f32 %v2304, 1.442695
        %v2361 = vpow.pop %v2360
        %v2362 = vmul.f32 %v2305, 1.442695
        %v2363 = vpow.pop %v2362
        %v2364 = vmul.f32 %v2306, 1.442695
        %v2365 = vpow.pop %v2364
        %v2366 = vmul.f32 %v2307, 1.442695
        %v2367 = vpow.pop %v2366
        %v2368 = vmul.f32 %v2308, 1.442695
        %v2369 = vpow.pop %v2368
        %v2370 = vmul.f32 %v2309, 1.442695
        %v2371 = vpow.pop %v2370
        %v2372 = vmul.f32 %v2310, 1.442695
        %v2373 = vpow.pop %v2372
        %v2374 = vmul.f32 %v2311, 1.442695
        %v2375 = vpow.pop %v2374
        %v2376 = vsel %vm1481, %v2313, 0.0
        %v2377 = vsel %vm1482, %v2315, 0.0
        %v2378 = vsel %vm1483, %v2317, 0.0
        %v2379 = vsel %vm1484, %v2319, 0.0
        %v2380 = vsel %vm1485, %v2321, 0.0
        %v2381 = vsel %vm1486, %v2323, 0.0
        %v2382 = vsel %vm1487, %v2325, 0.0
        %v2383 = vsel %vm1488, %v2327, 0.0
        %v2384 = vsel %vm1489, %v2329, 0.0
        %v2385 = vsel %vm1490, %v2331, 0.0
        %v2386 = vsel %vm1491, %v2333, 0.0
        %v2387 = vsel %vm1492, %v2335, 0.0
        %v2388 = vsel %vm1493, %v2337, 0.0
        %v2389 = vsel %vm1494, %v2339, 0.0
        %v2390 = vsel %vm1495, %v2341, 0.0
        %v2391 = vsel %vm1496, %v2343, 0.0
        %v2392 = vsel %vm1497, %v2345, 0.0
        %v2393 = vsel %vm1498, %v2347, 0.0
        %v2394 = vsel %vm1499, %v2349, 0.0
        %v2395 = vsel %vm1500, %v2351, 0.0
        %v2396 = vsel %vm1501, %v2353, 0.0
        %v2397 = vsel %vm1502, %v2355, 0.0
        %v2398 = vsel %vm1503, %v2357, 0.0
        %v2399 = vsel %vm1504, %v2359, 0.0
        %v2400 = vsel %vm1505, %v2361, 0.0
        %v2401 = vsel %vm1506, %v2363, 0.0
        %v2402 = vsel %vm1507, %v2365, 0.0
        %v2403 = vsel %vm1508, %v2367, 0.0
        %v2404 = vsel %vm1509, %v2369, 0.0
        %v2405 = vsel %vm1510, %v2371, 0.0
        %v2406 = vsel %vm1511, %v2373, 0.0
        %v2407 = vsel %vm1512, %v2375, 0.0
        %v2408 = vpack.c.bf16 %v2378, %v2376
        %v2409 = vpack.c.bf16 %v2379, %v2377
        %v2410 = vpack.c.bf16 %v2382, %v2380
        %v2411 = vpack.c.bf16 %v2383, %v2381
        %v2412 = vpack.c.bf16 %v2386, %v2384
        %v2413 = vpack.c.bf16 %v2387, %v2385
        %v2414 = vpack.c.bf16 %v2390, %v2388
        %v2415 = vpack.c.bf16 %v2391, %v2389
        %v2416 = vpack.c.bf16 %v2394, %v2392
        %v2417 = vpack.c.bf16 %v2395, %v2393
        %v2418 = vpack.c.bf16 %v2398, %v2396
        %v2419 = vpack.c.bf16 %v2399, %v2397
        %v2420 = vpack.c.bf16 %v2402, %v2400
        %v2421 = vpack.c.bf16 %v2403, %v2401
        %v2422 = vpack.c.bf16 %v2406, %v2404
        %v2423 = vpack.c.bf16 %v2407, %v2405
        %2424 = vmatprep.subr.bf16.mxu0 0
        %2425 = vmatpush1.bf16.msra.mxu0 %v715
        %2426 = vmatprep.subr.bf16.mxu0 0
        %2427 = vmatpush1.bf16.msra.mxu0 %v717
        %2428 = vmatprep.subr.bf16.mxu0 0
        %2429 = vmatpush1.bf16.msra.mxu0 %v719
        %2430 = vmatprep.subr.bf16.mxu0 0
        %2431 = vmatpush1.bf16.msra.mxu0 %v721
        %2432 = vmatprep.subr.bf16.mxu0 0
        %2433 = vmatpush1.bf16.msra.mxu0 %v723
        %2434 = vmatprep.subr.bf16.mxu0 0
        %2435 = vmatpush1.bf16.msra.mxu0 %v725
        %2436 = vmatprep.subr.bf16.mxu0 0
        %2437 = vmatpush1.bf16.msra.mxu0 %v727
        %2438 = vmatprep.subr.bf16.mxu0 0
        %2439 = vmatpush1.bf16.msra.mxu0 %v729
        %2440 = vmatprep.subr.bf16.mxu0 0
        %2441 = vmatpush1.bf16.msra.mxu0 %v731
        %2442 = vmatprep.subr.bf16.mxu0 0
        %2443 = vmatpush1.bf16.msra.mxu0 %v733
        %2444 = vmatprep.subr.bf16.mxu0 0
        %2445 = vmatpush1.bf16.msra.mxu0 %v735
        %2446 = vmatprep.subr.bf16.mxu0 0
        %2447 = vmatpush1.bf16.msra.mxu0 %v737
        %2448 = vmatprep.subr.bf16.mxu0 0
        %2449 = vmatpush1.bf16.msra.mxu0 %v739
        %2450 = vmatprep.subr.bf16.mxu0 0
        %2451 = vmatpush1.bf16.msra.mxu0 %v741
        %2452 = vmatprep.subr.bf16.mxu0 0
        %2453 = vmatpush1.bf16.msra.mxu0 %v743
        %2454 = vmatprep.subr.bf16.mxu0 0
        %2455 = vmatpush1.bf16.msra.mxu0 %v745
        %2456 = vmatprep.mubr.bf16.mxu0 %v2409
        %2457 = vmatmul.mubr.bf16.gmra.mrb[0].mxu0 %v2408
        %v2458 = vpop.f32.mrb[0].mxu0
        %v2459 = vadd.f32 0.0, %v2458
        %v2460 = vpop.f32.mrb[0].mxu0
        %v2461 = vpop.f32.mrb[0].mxu0
        %v2462 = vadd.f32 0.0, %v2461
        %v2463 = vpop.f32.mrb[0].mxu0
        %2464 = vmatprep.mubr.bf16.mxu0 %v2411
        %2465 = vmatmul.mubr.bf16.gmra.mrb[0].mxu0 %v2410
        %v2466 = vpop.f32.mrb[0].mxu0
        %v2467 = vadd.f32 0.0, %v2466
        %v2468 = vpop.f32.mrb[0].mxu0
        %v2469 = vpop.f32.mrb[0].mxu0
        %v2470 = vadd.f32 0.0, %v2469
        %v2471 = vpop.f32.mrb[0].mxu0
        %2472 = vmatprep.mubr.bf16.mxu0 %v2413
        %2473 = vmatmul.mubr.bf16.gmra.mrb[0].mxu0 %v2412
        %v2474 = vpop.f32.mrb[0].mxu0
        %v2475 = vadd.f32 0.0, %v2474
        %v2476 = vpop.f32.mrb[0].mxu0
        %v2477 = vpop.f32.mrb[0].mxu0
        %v2478 = vadd.f32 0.0, %v2477
        %v2479 = vpop.f32.mrb[0].mxu0
        %2480 = vmatprep.mubr.bf16.mxu0 %v2415
        %2481 = vmatmul.mubr.bf16.gmra.mrb[0].mxu0 %v2414
        %v2482 = vpop.f32.mrb[0].mxu0
        %v2483 = vadd.f32 0.0, %v2482
        %v2484 = vpop.f32.mrb[0].mxu0
        %v2485 = vpop.f32.mrb[0].mxu0
        %v2486 = vadd.f32 0.0, %v2485
        %v2487 = vpop.f32.mrb[0].mxu0
        %2488 = vmatprep.mubr.bf16.mxu0 %v2417
        %2489 = vmatmul.mubr.bf16.gmra.mrb[0].mxu0 %v2416
        %v2490 = vpop.f32.mrb[0].mxu0
        %v2491 = vadd.f32 0.0, %v2490
        %v2492 = vpop.f32.mrb[0].mxu0
        %v2493 = vpop.f32.mrb[0].mxu0
        %v2494 = vadd.f32 0.0, %v2493
        %v2495 = vpop.f32.mrb[0].mxu0
        %2496 = vmatprep.mubr.bf16.mxu0 %v2419
        %2497 = vmatmul.mubr.bf16.gmra.mrb[0].mxu0 %v2418
        %v2498 = vpop.f32.mrb[0].mxu0
        %v2499 = vadd.f32 0.0, %v2498
        %v2500 = vpop.f32.mrb[0].mxu0
        %v2501 = vpop.f32.mrb[0].mxu0
        %v2502 = vadd.f32 0.0, %v2501
        %v2503 = vpop.f32.mrb[0].mxu0
        %2504 = vmatprep.mubr.bf16.mxu0 %v2421
        %2505 = vmatmul.mubr.bf16.gmra.mrb[0].mxu0 %v2420
        %v2506 = vpop.f32.mrb[0].mxu0
        %v2507 = vadd.f32 0.0, %v2506
        %v2508 = vpop.f32.mrb[0].mxu0
        %v2509 = vpop.f32.mrb[0].mxu0
        %v2510 = vadd.f32 0.0, %v2509
        %v2511 = vpop.f32.mrb[0].mxu0
        %2512 = vmatprep.mubr.bf16.mxu0 %v2423
        %2513 = vmatmul.mubr.bf16.gmra.mrb[0].mxu0 %v2422
        %v2514 = vpop.f32.mrb[0].mxu0
        %v2515 = vadd.f32 0.0, %v2514
        %v2516 = vpop.f32.mrb[0].mxu0
        %v2517 = vpop.f32.mrb[0].mxu0
        %v2518 = vadd.f32 0.0, %v2517
        %v2519 = vpop.f32.mrb[0].mxu0
        %2520 = vdwg.mxu0
        %v2521 = vadd.f32 %v2376, %v2377
        %2522 = vadd.xlane.f32.xlu0 %v2521
        %v2523 = vpop.xlane.xlu0 %2522
        %v2524 = vadd.f32 %v2378, %v2379
        %2525 = vadd.xlane.f32.xlu0 %v2524
        %v2526 = vpop.xlane.xlu0 %2525
        %v2527 = vadd.f32 %v2380, %v2381
        %2528 = vadd.xlane.f32.xlu0 %v2527
        %v2529 = vpop.xlane.xlu0 %2528
        %v2530 = vadd.f32 %v2382, %v2383
        %2531 = vadd.xlane.f32.xlu0 %v2530
        %v2532 = vpop.xlane.xlu0 %2531
        %v2533 = vadd.f32 %v2384, %v2385
        %2534 = vadd.xlane.f32.xlu0 %v2533
        %v2535 = vpop.xlane.xlu0 %2534
        %v2536 = vadd.f32 %v2386, %v2387
        %2537 = vadd.xlane.f32.xlu0 %v2536
        %v2538 = vpop.xlane.xlu0 %2537
        %v2539 = vadd.f32 %v2388, %v2389
        %2540 = vadd.xlane.f32.xlu0 %v2539
        %v2541 = vpop.xlane.xlu0 %2540
        %v2542 = vadd.f32 %v2390, %v2391
        %2543 = vadd.xlane.f32.xlu0 %v2542
        %v2544 = vpop.xlane.xlu0 %2543
        %v2545 = vadd.f32 %v2392, %v2393
        %2546 = vadd.xlane.f32.xlu0 %v2545
        %v2547 = vpop.xlane.xlu0 %2546
        %v2548 = vadd.f32 %v2394, %v2395
        %2549 = vadd.xlane.f32.xlu0 %v2548
        %v2550 = vpop.xlane.xlu0 %2549
        %v2551 = vadd.f32 %v2396, %v2397
        %2552 = vadd.xlane.f32.xlu0 %v2551
        %v2553 = vpop.xlane.xlu0 %2552
        %v2554 = vadd.f32 %v2398, %v2399
        %2555 = vadd.xlane.f32.xlu0 %v2554
        %v2556 = vpop.xlane.xlu0 %2555
        %v2557 = vadd.f32 %v2400, %v2401
        %2558 = vadd.xlane.f32.xlu0 %v2557
        %v2559 = vpop.xlane.xlu0 %2558
        %v2560 = vadd.f32 %v2402, %v2403
        %2561 = vadd.xlane.f32.xlu0 %v2560
        %v2562 = vpop.xlane.xlu0 %2561
        %v2563 = vadd.f32 %v2404, %v2405
        %2564 = vadd.xlane.f32.xlu0 %v2563
        %v2565 = vpop.xlane.xlu0 %2564
        %v2566 = vadd.f32 %v2406, %v2407
        %2567 = vadd.xlane.f32.xlu0 %v2566
        %v2568 = vpop.xlane.xlu0 %2567
        %v2569 = vrcp.pop %v2523
        %v2570 = vrcp.pop %v2526
        %v2571 = vrcp.pop %v2529
        %v2572 = vrcp.pop %v2532
        %v2573 = vrcp.pop %v2535
        %v2574 = vrcp.pop %v2538
        %v2575 = vrcp.pop %v2541
        %v2576 = vrcp.pop %v2544
        %v2577 = vrcp.pop %v2547
        %v2578 = vrcp.pop %v2550
        %v2579 = vrcp.pop %v2553
        %v2580 = vrcp.pop %v2556
        %v2581 = vrcp.pop %v2559
        %v2582 = vrcp.pop %v2562
        %v2583 = vrcp.pop %v2565
        %v2584 = vrcp.pop %v2568
        %v2585 = vmul.f32 %v2459, %v2569
        %v2586 = vmul.f32 %v2462, %v2570
        %v2587 = vmul.f32 %v2467, %v2571
        %v2588 = vmul.f32 %v2470, %v2572
        %v2589 = vmul.f32 %v2475, %v2573
        %v2590 = vmul.f32 %v2478, %v2574
        %v2591 = vmul.f32 %v2483, %v2575
        %v2592 = vmul.f32 %v2486, %v2576
        %v2593 = vmul.f32 %v2491, %v2577
        %v2594 = vmul.f32 %v2494, %v2578
        %v2595 = vmul.f32 %v2499, %v2579
        %v2596 = vmul.f32 %v2502, %v2580
        %v2597 = vmul.f32 %v2507, %v2581
        %v2598 = vmul.f32 %v2510, %v2582
        %v2599 = vmul.f32 %v2515, %v2583
        %v2600 = vmul.f32 %v2518, %v2584
        %v2601 = vld [vmem:[%s6 + $0x1] sm:$0x1]
        %v2602 = vlaneseq
        %v2603 = vshrl.u32 %v2602, 7
        %v2604 = vsub.s32 0, %v2603
        %v2605 = vrot.slane %v2601, %v2604
        %v2606 = vadd.f32 %v2585, %v2605
        %v2607 = vadd.f32 %v2586, %v2605
        %v2608 = vadd.f32 %v2587, %v2605
        %v2609 = vadd.f32 %v2588, %v2605
        %v2610 = vadd.f32 %v2589, %v2605
        %v2611 = vadd.f32 %v2590, %v2605
        %v2612 = vadd.f32 %v2591, %v2605
        %v2613 = vadd.f32 %v2592, %v2605
        %v2614 = vadd.f32 %v2593, %v2605
        %v2615 = vadd.f32 %v2594, %v2605
        %v2616 = vadd.f32 %v2595, %v2605
        %v2617 = vadd.f32 %v2596, %v2605
        %v2618 = vadd.f32 %v2597, %v2605
        %v2619 = vadd.f32 %v2598, %v2605
        %v2620 = vadd.f32 %v2599, %v2605
        %v2621 = vadd.f32 %v2600, %v2605
        %vm2622 = vcmp.gt.f32.partialorder %v2606, 0.0
        %vm2623 = vcmp.gt.f32.partialorder %v2607, 0.0
        %vm2624 = vcmp.gt.f32.partialorder %v2608, 0.0
        %vm2625 = vcmp.gt.f32.partialorder %v2609, 0.0
        %vm2626 = vcmp.gt.f32.partialorder %v2610, 0.0
        %vm2627 = vcmp.gt.f32.partialorder %v2611, 0.0
        %vm2628 = vcmp.gt.f32.partialorder %v2612, 0.0
        %vm2629 = vcmp.gt.f32.partialorder %v2613, 0.0
        %vm2630 = vcmp.gt.f32.partialorder %v2614, 0.0
        %vm2631 = vcmp.gt.f32.partialorder %v2615, 0.0
        %vm2632 = vcmp.gt.f32.partialorder %v2616, 0.0
        %vm2633 = vcmp.gt.f32.partialorder %v2617, 0.0
        %vm2634 = vcmp.gt.f32.partialorder %v2618, 0.0
        %vm2635 = vcmp.gt.f32.partialorder %v2619, 0.0
        %vm2636 = vcmp.gt.f32.partialorder %v2620, 0.0
        %vm2637 = vcmp.gt.f32.partialorder %v2621, 0.0
        %v2638 = vmul.f32 %v1951, %v2606
        %v2639 = vmul.f32 %v1951, %v2607
        %v2640 = vmul.f32 %v1951, %v2608
        %v2641 = vmul.f32 %v1951, %v2609
        %v2642 = vmul.f32 %v1951, %v2610
        %v2643 = vmul.f32 %v1951, %v2611
        %v2644 = vmul.f32 %v1951, %v2612
        %v2645 = vmul.f32 %v1951, %v2613
        %v2646 = vmul.f32 %v1951, %v2614
        %v2647 = vmul.f32 %v1951, %v2615
        %v2648 = vmul.f32 %v1951, %v2616
        %v2649 = vmul.f32 %v1951, %v2617
        %v2650 = vmul.f32 %v1951, %v2618
        %v2651 = vmul.f32 %v1951, %v2619
        %v2652 = vmul.f32 %v1951, %v2620
        %v2653 = vmul.f32 %v1951, %v2621
        %v2654 = vsel %vm2622, %v2606, %v2638
        %v2655 = vsel %vm2623, %v2607, %v2639
        %v2656 = vsel %vm2624, %v2608, %v2640
        %v2657 = vsel %vm2625, %v2609, %v2641
        %v2658 = vsel %vm2626, %v2610, %v2642
        %v2659 = vsel %vm2627, %v2611, %v2643
        %v2660 = vsel %vm2628, %v2612, %v2644
        %v2661 = vsel %vm2629, %v2613, %v2645
        %v2662 = vsel %vm2630, %v2614, %v2646
        %v2663 = vsel %vm2631, %v2615, %v2647
        %v2664 = vsel %vm2632, %v2616, %v2648
        %v2665 = vsel %vm2633, %v2617, %v2649
        %v2666 = vsel %vm2634, %v2618, %v2650
        %v2667 = vsel %vm2635, %v2619, %v2651
        %v2668 = vsel %vm2636, %v2620, %v2652
        %v2669 = vsel %vm2637, %v2621, %v2653
        %2670 = vst [vmem:[%s356] sm:$0xff] %v2654
        %2671 = vst [vmem:[%s356 + $0x8] sm:$0xff] %v2655
        %2672 = vst [vmem:[%s356 + $0x10] sm:$0xff] %v2656
        %2673 = vst [vmem:[%s356 + $0x18] sm:$0xff] %v2657
        %2674 = vst [vmem:[%s356 + $0x20] sm:$0xff] %v2658
        %2675 = vst [vmem:[%s356 + $0x28] sm:$0xff] %v2659
        %2676 = vst [vmem:[%s356 + $0x30] sm:$0xff] %v2660
        %2677 = vst [vmem:[%s356 + $0x38] sm:$0xff] %v2661
        %2678 = vst [vmem:[%s356 + $0x40] sm:$0xff] %v2662
        %2679 = vst [vmem:[%s356 + $0x48] sm:$0xff] %v2663
        %2680 = vst [vmem:[%s356 + $0x50] sm:$0xff] %v2664
        %2681 = vst [vmem:[%s356 + $0x58] sm:$0xff] %v2665
        %2682 = vst [vmem:[%s356 + $0x60] sm:$0xff] %v2666
        %2683 = vst [vmem:[%s356 + $0x68] sm:$0xff] %v2667
        %2684 = vst [vmem:[%s356 + $0x70] sm:$0xff] %v2668
        %2685 = vst [vmem:[%s356 + $0x78] sm:$0xff] %v2669
        %s2686 = sand.u32 %s214, 1
        %s2687 = scalar_lea.sflag [#allocation4], %s2686
        %s2688 = sand.u32 %s214, 1
        %s2689 = smul.addr %s2688, 128
        %s2690 = scalar_lea.vmem [#allocation3], %s2689
        %s2691 = sand.u32 %s240, 1
        %s2692 = scalar_lea.sflag [#allocation6], %s2691
        %s2693 = sand.u32 %s240, 1
        %s2694 = smul.addr %s2693, 128
        %s2695 = scalar_lea.vmem [#allocation5], %s2694
        // Predicated region
        $region53: #{tpu_custom_call.1} parent=51 // pred_check
          %p2696 = pneg %p224
        $region54: #{tpu_custom_call.1} parent=51 // pred_check_branch
          %2698 = sbr.rel (%p2696) target = $region56
        $region55: #{tpu_custom_call.1} parent=51 // pred_region
          %s2699 = smul.u32 16, %s28
          %s2701 = ssub.s32 2048, 2048
          %2702 = vsyncadd %s2687, %s2701
          %s2703 = smul.addr %s2699, 128
          %s2704 = scalar_lea.hbm %s8, %s2703
          %s2705 = sshll.u32 %s2690, 4
          %s2706 = int_to_ptr.vmem [resolvable:$true] %s2705
          %2711 = dma.vmem_to_hbm [thread:$0]  %s2706, 2048, %s2704, %s2687, 128, 128, 8
        $region56: #{tpu_custom_call.1} parent=51 // pred_fallthru
          _
        // Predicated region
        $region57: #{tpu_custom_call.1} parent=51 // pred_check
          %p2712 = pneg %p250
        $region58: #{tpu_custom_call.1} parent=51 // pred_check_branch
          %2714 = sbr.rel (%p2712) target = $region60
        $region59: #{tpu_custom_call.1} parent=51 // pred_region
          %s2715 = smul.u32 16, %s28
          %s2717 = ssub.s32 2048, 2048
          %2718 = vsyncadd %s2692, %s2717
          %s2719 = smul.addr %s2715, 128
          %s2720 = scalar_lea.hbm %s9, %s2719
          %s2721 = sshll.u32 %s2695, 4
          %s2722 = int_to_ptr.vmem [resolvable:$true] %s2721
          %2727 = dma.vmem_to_hbm [thread:$0]  %s2722, 2048, %s2720, %s2692, 128, 128, 8
        $region60: #{tpu_custom_call.1} parent=51 // pred_fallthru
          _
      $region52: #{tpu_custom_call.1} parent=5 // pred_fallthru
        _
      %p2728 = scmp.le.s32.totalorder 2, %s23
      // Predicated region
      $region61: #{tpu_custom_call.1} parent=5 // pred_check
        %p2729 = pneg %p2728
      $region62: #{tpu_custom_call.1} parent=5 // pred_check_branch
        %2731 = sbr.rel (%p2729) target = $region64
      $region63: #{tpu_custom_call.1} parent=5 // pred_region
        %s2732 = ssub.s32 %s23, 2
        // Predicated region
        $region65: #{tpu_custom_call.1} parent=63 // pred_check
          %p2733 = pneg %p230
        $region66: #{tpu_custom_call.1} parent=63 // pred_check_branch
          %2735 = sbr.rel (%p2733) target = $region68
        $region67: #{tpu_custom_call.1} parent=63 // pred_region
          %s2736 = sand.u32 %s215, 1
          %s2737 = scalar_lea.sflag [#allocation4], %s2736
          %s2738 = sand.u32 %s215, 1
          %s2739 = smul.addr %s2738, 128
          %s2740 = scalar_lea.vmem [#allocation3], %s2739
          %2741 = dma.done %s2737, 2048
        $region68: #{tpu_custom_call.1} parent=63 // pred_fallthru
          _
        // Predicated region
        $region69: #{tpu_custom_call.1} parent=63 // pred_check
          %p2742 = pneg %p256
        $region70: #{tpu_custom_call.1} parent=63 // pred_check_branch
          %2744 = sbr.rel (%p2742) target = $region72
        $region71: #{tpu_custom_call.1} parent=63 // pred_region
          %s2745 = sand.u32 %s241, 1
          %s2746 = scalar_lea.sflag [#allocation6], %s2745
          %s2747 = sand.u32 %s241, 1
          %s2748 = smul.addr %s2747, 128
          %s2749 = scalar_lea.vmem [#allocation5], %s2748
          %2750 = dma.done %s2746, 2048
        $region72: #{tpu_custom_call.1} parent=63 // pred_fallthru
          _
      $region64: #{tpu_custom_call.1} parent=5 // pred_fallthru
        _
    $region6: #{tpu_custom_call.1} parent=1 // loop_footer
      %s27 = sadd.s32 1, %s23
    $region7: #{tpu_custom_call.1} parent=1 // loop_footer_branch
      %22 = sbr.rel target = $region3
    $region8: #{tpu_custom_call.1} parent=1 // loop_exit
      _
    %2751 = vsyncpa [#allocation4], 1
    %s2752 = scalar_lea.sflag [#allocation4], 1
    %2753 = vsyncpa %s2752, 1
    %2754 = vsyncpa [#allocation6], 1
    %s2755 = scalar_lea.sflag [#allocation6], 1
    %2756 = vsyncpa %s2755, 1

</llo_original>
